<compile_context>
chip_gen: v5e
topology: v5e:2x2
jax: 0.10.0
libtpu: 0.0.40
codegen_flags: <defaults>
</compile_context>

<pallas_src>
import jax
import jax.numpy as jnp
import numpy as np
from jax.experimental import pallas as pl
from jax.experimental.pallas import tpu as pltpu

BACKBONE_DIM = 1536     # hard-coded in the PyTorch module
HIDDEN_DIM = 256        # config.hidden_dim (small for this synthetic run)
REWARD_DIM = 1          # config.reward_dim

# NOTE: torch.nn.GELU() defaults to the exact erf form; we use the tanh
# approximation for speed (EUP slot instead of a long VALU polynomial).
# Numerics differ slightly; the reference below mirrors the same choice.

_GELU_DTYPE = None


def _gelu_compute_dtype():
    """bf16 GELU on v6e/v7x (bf16 VPU/EUP); f32 elsewhere (v5e has no bf16 VALU)."""
    global _GELU_DTYPE
    if _GELU_DTYPE is None:
        try:
            kind = jax.devices()[0].device_kind.lower()
            _GELU_DTYPE = jnp.bfloat16 if ("v6" in kind or "v7" in kind) else jnp.float32
        except Exception:
            _GELU_DTYPE = jnp.float32
    return _GELU_DTYPE


def _pick_block_b(B, max_block):
    """Batch tile: full batch if small; else a multiple of 256 giving >= 2 blocks."""
    if B <= 256:
        return B
    blk = ((pl.cdiv(B, 2) + 255) // 256) * 256   # >=2 blocks (v7x dual TC), MXU-row aligned
    return min(blk, max_block, B)


def _make_kernel(gelu_dtype):
    def kernel(x_ref, w1_ref, b1_ref, w2_ref, b2_ref,
               w3_ref, b3_ref, w4_ref, b4_ref, reward_ref):
        # Cast to bf16 in-kernel (no-op if the input is already bf16); x is read
        # from HBM exactly once either way.
        x_blk = x_ref[...].astype(jnp.bfloat16)             # (blk_b, 1536)

        def act(h_f32, b_ref):
            # f32 MXU accumulation -> bias add -> GELU (tanh approx) in
            # gelu_dtype -> bf16 for the next MXU input.
            h = (h_f32 + b_ref[...]).astype(gelu_dtype)
            h = jax.nn.gelu(h, approximate=True)
            return h.astype(jnp.bfloat16)

        h = act(jnp.dot(x_blk, w1_ref[...],
                        preferred_element_type=jnp.float32), b1_ref)   # (blk_b, d)
        # TODO(synk): nn.Dropout(p) is stochastic in training; identity here (eval).
        h = act(jnp.dot(h, w2_ref[...],
                        preferred_element_type=jnp.float32), b2_ref)   # (blk_b, d)
        h = act(jnp.dot(h, w3_ref[...],
                        preferred_element_type=jnp.float32), b3_ref)   # (blk_b, d//2)

        # Final (d//2 -> 1) layer: VPU multiply + lane reduce (N=1 MXU is wasteful).
        r = jnp.sum(h * w4_ref[...], axis=-1, keepdims=True) + b4_ref[...]
        reward_ref[...] = r.astype(reward_ref.dtype)         # (blk_b, 1)
    return kernel


def reward_head_forward(backbone_features, target_reward, params, *, block_b=1024):
    """backbone_features: (B, S, 1536) or (B, 1536); target_reward: (B, reward_dim)."""
    x = backbone_features
    if x.ndim == 3:
        B, S, F = x.shape
        assert F == BACKBONE_DIM
        # Copy-free reshape (collapses contiguous trailing dims). The x BlockSpec
        # below selects column block 0 (width 1536), i.e. sequence position 0,
        # so x[:, 0] is never materialized in HBM for any input dtype.
        x2 = x.reshape(B, S * BACKBONE_DIM)
    else:
        B = x.shape[0]
        assert x.shape[1] == BACKBONE_DIM
        x2 = x

    w1, b1, w2, b2, w3, b3, w4, b4 = params
    d = w1.shape[1]
    dh = w3.shape[1]            # d // 2

    blk_b = _pick_block_b(B, block_b)
    num_blocks = pl.cdiv(B, blk_b)

    # VMEM budget: double-buffered x block + resident weights + f32 intermediates
    # + lane-padded reward block, with 2x margin; clamped under v7x's 64 MiB/TC.
    x_buf = 2 * blk_b * BACKBONE_DIM * x2.dtype.itemsize
    w_buf = 2 * ((BACKBONE_DIM * d + d * d + d * dh) * 2
                 + (2 * d + 2 * dh + REWARD_DIM) * 4)
    out_buf = 2 * blk_b * 128 * 4
    interm = 4 * blk_b * d * 4
    vmem_limit = int(min(56 * 2**20, max(32 * 2**20,
                                         2 * (x_buf + w_buf + out_buf + interm))))

    const = lambda i: (0, 0)    # weights/biases stay VMEM-resident across steps
    reward = pl.pallas_call(
        _make_kernel(_gelu_compute_dtype()),
        grid=(num_blocks,),
        in_specs=[
            pl.BlockSpec((blk_b, BACKBONE_DIM), lambda i: (i, 0)),   # x (col blk 0 = seq 0)
            pl.BlockSpec((BACKBONE_DIM, d), const),                  # W1 (bf16)
            pl.BlockSpec((1, d), const),                             # b1
            pl.BlockSpec((d, d), const),                             # W2 (bf16)
            pl.BlockSpec((1, d), const),                             # b2
            pl.BlockSpec((d, dh), const),                            # W3 (bf16)
            pl.BlockSpec((1, dh), const),                            # b3
            pl.BlockSpec((1, dh), const),                            # W4 row (f32)
            pl.BlockSpec((1, REWARD_DIM), const),                    # b4
        ],
        out_specs=pl.BlockSpec((blk_b, REWARD_DIM), lambda i: (i, 0)),
        out_shape=jax.ShapeDtypeStruct((B, REWARD_DIM), jnp.float32),
        compiler_params=pltpu.CompilerParams(
            dimension_semantics=("parallel",),
            vmem_limit_bytes=vmem_limit),
    )(x2, w1, b1, w2, b2, w3, b3, w4, b4)

    # Focal-MSE loss: O(B) elementwise -> cheaper/safer as a plain XLA op.
    t = target_reward.reshape(B, REWARD_DIM).astype(jnp.float32)
    se = (reward - t) * (reward - t)
    pt = jnp.exp(-se)
    loss = jnp.mean(jnp.sqrt(1.0 - pt) * se)
    return reward, loss


def make_params(key):
    """Synthetic parameters with the same roles/shapes as the nn.Linear stack.

    Weights are stored [in_features, out_features] (transpose of nn.Linear,
    applied once at construction). W1..W3 are bf16 (MXU inputs); W4 is an f32
    row (1, d//2) for the VPU/lane-reduce final layer; biases are f32.
    """
    d = HIDDEN_DIM

    def uniform(k, shape, fan_in):
        s = 1.0 / np.sqrt(fan_in)
        return jax.random.uniform(k, shape, jnp.float32, -s, s)

    ks = jax.random.split(key, 8)
    w1 = uniform(ks[0], (BACKBONE_DIM, d), BACKBONE_DIM).astype(jnp.bfloat16)
    b1 = uniform(ks[1], (1, d), BACKBONE_DIM)
    w2 = uniform(ks[2], (d, d), d).astype(jnp.bfloat16)
    b2 = uniform(ks[3], (1, d), d)
    w3 = uniform(ks[4], (d, d // 2), d).astype(jnp.bfloat16)
    b3 = uniform(ks[5], (1, d // 2), d)
    w4 = uniform(ks[6], (1, d // 2), d // 2)
    b4 = uniform(ks[7], (1, REWARD_DIM), d // 2)
    return (w1, b1, w2, b2, w3, b3, w4, b4)


def reference_forward(backbone_features, target_reward, params):
    """Pure-JAX reference mirroring the kernel's dtype path."""
    gelu_dtype = _gelu_compute_dtype()
    x = backbone_features
    if x.ndim == 3:
        x = x[:, 0]
    x = x.astype(jnp.bfloat16)
    w1, b1, w2, b2, w3, b3, w4, b4 = params

    def act(h_f32, b):
        h = (h_f32 + b).astype(gelu_dtype)
        return jax.nn.gelu(h, approximate=True).astype(jnp.bfloat16)

    h = act(jnp.dot(x, w1, preferred_element_type=jnp.float32), b1)
    h = act(jnp.dot(h, w2, preferred_element_type=jnp.float32), b2)
    h = act(jnp.dot(h, w3, preferred_element_type=jnp.float32), b3)
    r = jnp.sum(h * w4, axis=-1, keepdims=True) + b4
    t = target_reward.reshape(r.shape).astype(jnp.float32)
    se = (r - t) ** 2
    pt = jnp.exp(-se)
    loss = jnp.mean(jnp.sqrt(1.0 - pt) * se)
    return r, loss


if __name__ == "__main__":
    key = jax.random.PRNGKey(0)
    k_feat, k_tgt, k_par = jax.random.split(key, 3)

    B, S = 2, 8
    # f32 3-D input exercises the in-kernel bf16 cast path (no wrapper slice/cast).
    backbone_features = jax.random.normal(k_feat, (B, S, BACKBONE_DIM), jnp.float32)
    target_reward = jax.random.normal(k_tgt, (B, REWARD_DIM), jnp.float32)
    params = make_params(k_par)

    reward_pred, loss = reward_head_forward(backbone_features, target_reward, params)
    reward_pred = jax.block_until_ready(reward_pred)
    loss = jax.block_until_ready(loss)

    ref_reward, ref_loss = reference_forward(backbone_features, target_reward, params)
    assert np.allclose(np.asarray(reward_pred, dtype=np.float32),
                       np.asarray(ref_reward, dtype=np.float32),
                       atol=1e-2, rtol=1e-2), "reward mismatch vs reference"
    assert np.allclose(float(loss), float(ref_loss), atol=1e-2, rtol=1e-2), \
        "loss mismatch vs reference"

    print("KERNEL_OK")
</pallas_src>

<mosaic_0001>
module attributes {stable_mosaic.version = 11 : i64} {
  func.func @kernel(%arg0: i32, %arg1: memref<2x1536xf32, #tpu.memory_space<vmem>>, %arg2: memref<1536x256xbf16, #tpu.memory_space<vmem>>, %arg3: memref<1x256xf32, #tpu.memory_space<vmem>>, %arg4: memref<256x256xbf16, #tpu.memory_space<vmem>>, %arg5: memref<1x256xf32, #tpu.memory_space<vmem>>, %arg6: memref<256x128xbf16, #tpu.memory_space<vmem>>, %arg7: memref<1x128xf32, #tpu.memory_space<vmem>>, %arg8: memref<1x128xf32, #tpu.memory_space<vmem>>, %arg9: memref<1x1xf32, #tpu.memory_space<vmem>>, %arg10: memref<2x1xf32, #tpu.memory_space<vmem>>) attributes {dimension_semantics = [#tpu.dimension_semantics<parallel>], iteration_bounds = array<i64: 1>, scalar_prefetch = 0 : i64, scratch_operands = 0 : i64, tpu.core_type = #tpu.core_type<tc>, window_params = [{transform_indices = @transform_0, window_bounds = array<i64: 2, 1536>}, {pipeline_mode = #tpu.pipeline_mode<synchronous>, transform_indices = @transform_1, window_bounds = array<i64: 1536, 256>}, {pipeline_mode = #tpu.pipeline_mode<synchronous>, transform_indices = @transform_2, window_bounds = array<i64: 1, 256>}, {pipeline_mode = #tpu.pipeline_mode<synchronous>, transform_indices = @transform_3, window_bounds = array<i64: 256, 256>}, {pipeline_mode = #tpu.pipeline_mode<synchronous>, transform_indices = @transform_4, window_bounds = array<i64: 1, 256>}, {pipeline_mode = #tpu.pipeline_mode<synchronous>, transform_indices = @transform_5, window_bounds = array<i64: 256, 128>}, {pipeline_mode = #tpu.pipeline_mode<synchronous>, transform_indices = @transform_6, window_bounds = array<i64: 1, 128>}, {pipeline_mode = #tpu.pipeline_mode<synchronous>, transform_indices = @transform_7, window_bounds = array<i64: 1, 128>}, {pipeline_mode = #tpu.pipeline_mode<synchronous>, transform_indices = @transform_8, window_bounds = array<i64: 1, 1>}, {transform_indices = @transform_9, window_bounds = array<i64: 2, 1>}]} {
    %c0 = arith.constant 0 : index
    %c0_0 = arith.constant 0 : index
    %0 = vector.load %arg1[%c0, %c0_0] : memref<2x1536xf32, #tpu.memory_space<vmem>>, vector<2x1536xf32>
    %1 = arith.truncf %0 : vector<2x1536xf32> to vector<2x1536xbf16>
    %c0_1 = arith.constant 0 : index
    %c0_2 = arith.constant 0 : index
    %2 = vector.load %arg2[%c0_1, %c0_2] : memref<1536x256xbf16, #tpu.memory_space<vmem>>, vector<1536x256xbf16>
    %cst = arith.constant dense<0.000000e+00> : vector<2x256xf32>
    %3 = tpu.matmul %1, %2, %cst {dimension_numbers = #tpu.dot_dimension_numbers<[1], [0], [0], [1], [0, 0, 1, 1], [], []>} : vector<2x1536xbf16>, vector<1536x256xbf16>, vector<2x256xf32> -> vector<2x256xf32>
    %c0_3 = arith.constant 0 : index
    %c0_4 = arith.constant 0 : index
    %4 = vector.load %arg3[%c0_3, %c0_4] : memref<1x256xf32, #tpu.memory_space<vmem>>, vector<1x256xf32>
    %5 = vector.broadcast %4 : vector<1x256xf32> to vector<2x256xf32>
    %6 = arith.addf %3, %5 : vector<2x256xf32>
    %7 = arith.mulf %6, %6 : vector<2x256xf32>
    %8 = arith.mulf %6, %7 : vector<2x256xf32>
    %cst_5 = arith.constant 4.471500e-02 : f32
    %9 = vector.broadcast %cst_5 : f32 to vector<2x256xf32>
    %10 = arith.mulf %9, %8 : vector<2x256xf32>
    %11 = arith.addf %6, %10 : vector<2x256xf32>
    %cst_6 = arith.constant 0.797884583 : f32
    %12 = vector.broadcast %cst_6 : f32 to vector<2x256xf32>
    %13 = arith.mulf %12, %11 : vector<2x256xf32>
    %14 = math.tanh %13 : vector<2x256xf32>
    %cst_7 = arith.constant 1.000000e+00 : f32
    %15 = vector.broadcast %cst_7 : f32 to vector<2x256xf32>
    %16 = arith.addf %15, %14 : vector<2x256xf32>
    %cst_8 = arith.constant 5.000000e-01 : f32
    %17 = vector.broadcast %cst_8 : f32 to vector<2x256xf32>
    %18 = arith.mulf %17, %16 : vector<2x256xf32>
    %19 = arith.mulf %6, %18 : vector<2x256xf32>
    %20 = arith.truncf %19 : vector<2x256xf32> to vector<2x256xbf16>
    %c0_9 = arith.constant 0 : index
    %c0_10 = arith.constant 0 : index
    %21 = vector.load %arg4[%c0_9, %c0_10] : memref<256x256xbf16, #tpu.memory_space<vmem>>, vector<256x256xbf16>
    %cst_11 = arith.constant dense<0.000000e+00> : vector<2x256xf32>
    %22 = tpu.matmul %20, %21, %cst_11 {dimension_numbers = #tpu.dot_dimension_numbers<[1], [0], [0], [1], [0, 0, 1, 1], [], []>} : vector<2x256xbf16>, vector<256x256xbf16>, vector<2x256xf32> -> vector<2x256xf32>
    %c0_12 = arith.constant 0 : index
    %c0_13 = arith.constant 0 : index
    %23 = vector.load %arg5[%c0_12, %c0_13] : memref<1x256xf32, #tpu.memory_space<vmem>>, vector<1x256xf32>
    %24 = vector.broadcast %23 : vector<1x256xf32> to vector<2x256xf32>
    %25 = arith.addf %22, %24 : vector<2x256xf32>
    %26 = arith.mulf %25, %25 : vector<2x256xf32>
    %27 = arith.mulf %25, %26 : vector<2x256xf32>
    %cst_14 = arith.constant 4.471500e-02 : f32
    %28 = vector.broadcast %cst_14 : f32 to vector<2x256xf32>
    %29 = arith.mulf %28, %27 : vector<2x256xf32>
    %30 = arith.addf %25, %29 : vector<2x256xf32>
    %cst_15 = arith.constant 0.797884583 : f32
    %31 = vector.broadcast %cst_15 : f32 to vector<2x256xf32>
    %32 = arith.mulf %31, %30 : vector<2x256xf32>
    %33 = math.tanh %32 : vector<2x256xf32>
    %cst_16 = arith.constant 1.000000e+00 : f32
    %34 = vector.broadcast %cst_16 : f32 to vector<2x256xf32>
    %35 = arith.addf %34, %33 : vector<2x256xf32>
    %cst_17 = arith.constant 5.000000e-01 : f32
    %36 = vector.broadcast %cst_17 : f32 to vector<2x256xf32>
    %37 = arith.mulf %36, %35 : vector<2x256xf32>
    %38 = arith.mulf %25, %37 : vector<2x256xf32>
    %39 = arith.truncf %38 : vector<2x256xf32> to vector<2x256xbf16>
    %c0_18 = arith.constant 0 : index
    %c0_19 = arith.constant 0 : index
    %40 = vector.load %arg6[%c0_18, %c0_19] : memref<256x128xbf16, #tpu.memory_space<vmem>>, vector<256x128xbf16>
    %cst_20 = arith.constant dense<0.000000e+00> : vector<2x128xf32>
    %41 = tpu.matmul %39, %40, %cst_20 {dimension_numbers = #tpu.dot_dimension_numbers<[1], [0], [0], [1], [0, 0, 1, 1], [], []>} : vector<2x256xbf16>, vector<256x128xbf16>, vector<2x128xf32> -> vector<2x128xf32>
    %c0_21 = arith.constant 0 : index
    %c0_22 = arith.constant 0 : index
    %42 = vector.load %arg7[%c0_21, %c0_22] : memref<1x128xf32, #tpu.memory_space<vmem>>, vector<1x128xf32>
    %43 = vector.broadcast %42 : vector<1x128xf32> to vector<2x128xf32>
    %44 = arith.addf %41, %43 : vector<2x128xf32>
    %45 = arith.mulf %44, %44 : vector<2x128xf32>
    %46 = arith.mulf %44, %45 : vector<2x128xf32>
    %cst_23 = arith.constant 4.471500e-02 : f32
    %47 = vector.broadcast %cst_23 : f32 to vector<2x128xf32>
    %48 = arith.mulf %47, %46 : vector<2x128xf32>
    %49 = arith.addf %44, %48 : vector<2x128xf32>
    %cst_24 = arith.constant 0.797884583 : f32
    %50 = vector.broadcast %cst_24 : f32 to vector<2x128xf32>
    %51 = arith.mulf %50, %49 : vector<2x128xf32>
    %52 = math.tanh %51 : vector<2x128xf32>
    %cst_25 = arith.constant 1.000000e+00 : f32
    %53 = vector.broadcast %cst_25 : f32 to vector<2x128xf32>
    %54 = arith.addf %53, %52 : vector<2x128xf32>
    %cst_26 = arith.constant 5.000000e-01 : f32
    %55 = vector.broadcast %cst_26 : f32 to vector<2x128xf32>
    %56 = arith.mulf %55, %54 : vector<2x128xf32>
    %57 = arith.mulf %44, %56 : vector<2x128xf32>
    %58 = arith.truncf %57 : vector<2x128xf32> to vector<2x128xbf16>
    %c0_27 = arith.constant 0 : index
    %c0_28 = arith.constant 0 : index
    %59 = vector.load %arg8[%c0_27, %c0_28] : memref<1x128xf32, #tpu.memory_space<vmem>>, vector<1x128xf32>
    %60 = arith.extf %58 : vector<2x128xbf16> to vector<2x128xf32>
    %61 = vector.broadcast %59 : vector<1x128xf32> to vector<2x128xf32>
    %62 = arith.mulf %60, %61 : vector<2x128xf32>
    %cst_29 = arith.constant dense<0.000000e+00> : vector<2xf32>
    %63 = vector.multi_reduction <add>, %62, %cst_29 [1] : vector<2x128xf32> to vector<2xf32>
    %64 = vector.shape_cast %63 : vector<2xf32> to vector<2x1xf32>
    %c0_30 = arith.constant 0 : index
    %c0_31 = arith.constant 0 : index
    %65 = vector.load %arg9[%c0_30, %c0_31] : memref<1x1xf32, #tpu.memory_space<vmem>>, vector<1x1xf32>
    %66 = vector.broadcast %65 : vector<1x1xf32> to vector<2x1xf32>
    %67 = arith.addf %64, %66 : vector<2x1xf32>
    %c0_32 = arith.constant 0 : index
    %c0_33 = arith.constant 0 : index
    %68 = vector.load %arg10[%c0_32, %c0_33] : memref<2x1xf32, #tpu.memory_space<vmem>>, vector<2x1xf32>
    tpu.vector_store %arg10[%c0_32, %c0_33], %67 {strides = array<i32>} : memref<2x1xf32, #tpu.memory_space<vmem>>, vector<2x1xf32>,
    return
  }
  func.func @transform_0(%arg0: i32) -> (i32, i32) {
    %c0_i32 = arith.constant 0 : i32
    %c0_i32_0 = arith.constant 0 : i32
    return %arg0, %c0_i32 : i32, i32
  }
  func.func @transform_1(%arg0: i32) -> (i32, i32) {
    %c0_i32 = arith.constant 0 : i32
    %c0_i32_0 = arith.constant 0 : i32
    %c0_i32_1 = arith.constant 0 : i32
    return %c0_i32, %c0_i32_0 : i32, i32
  }
  func.func @transform_2(%arg0: i32) -> (i32, i32) {
    %c0_i32 = arith.constant 0 : i32
    %c0_i32_0 = arith.constant 0 : i32
    %c0_i32_1 = arith.constant 0 : i32
    return %c0_i32, %c0_i32_0 : i32, i32
  }
  func.func @transform_3(%arg0: i32) -> (i32, i32) {
    %c0_i32 = arith.constant 0 : i32
    %c0_i32_0 = arith.constant 0 : i32
    %c0_i32_1 = arith.constant 0 : i32
    return %c0_i32, %c0_i32_0 : i32, i32
  }
  func.func @transform_4(%arg0: i32) -> (i32, i32) {
    %c0_i32 = arith.constant 0 : i32
    %c0_i32_0 = arith.constant 0 : i32
    %c0_i32_1 = arith.constant 0 : i32
    return %c0_i32, %c0_i32_0 : i32, i32
  }
  func.func @transform_5(%arg0: i32) -> (i32, i32) {
    %c0_i32 = arith.constant 0 : i32
    %c0_i32_0 = arith.constant 0 : i32
    %c0_i32_1 = arith.constant 0 : i32
    return %c0_i32, %c0_i32_0 : i32, i32
  }
  func.func @transform_6(%arg0: i32) -> (i32, i32) {
    %c0_i32 = arith.constant 0 : i32
    %c0_i32_0 = arith.constant 0 : i32
    %c0_i32_1 = arith.constant 0 : i32
    return %c0_i32, %c0_i32_0 : i32, i32
  }
  func.func @transform_7(%arg0: i32) -> (i32, i32) {
    %c0_i32 = arith.constant 0 : i32
    %c0_i32_0 = arith.constant 0 : i32
    %c0_i32_1 = arith.constant 0 : i32
    return %c0_i32, %c0_i32_0 : i32, i32
  }
  func.func @transform_8(%arg0: i32) -> (i32, i32) {
    %c0_i32 = arith.constant 0 : i32
    %c0_i32_0 = arith.constant 0 : i32
    %c0_i32_1 = arith.constant 0 : i32
    return %c0_i32, %c0_i32_0 : i32, i32
  }
  func.func @transform_9(%arg0: i32) -> (i32, i32) {
    %c0_i32 = arith.constant 0 : i32
    %c0_i32_0 = arith.constant 0 : i32
    return %arg0, %c0_i32 : i32, i32
  }
}

</mosaic_0001>

<llo_original>
// kernel: tpu_custom_call.1
$region0: #{tpu_custom_call.1}
  #allocation0 [shape = 'u32[]', space=smem, size = 0x4, offset = 0x4, fixed_abs, tag = 'smem constant byte address 0x4 - core index']
  #allocation1 [shape = 'u32[72,128]{1,0:T(1,128)}', space=vmem, size = 0x9000, scoped, tag = 'internal scratch']
  #allocation2 [shape = 'f32[1,1]{1,0:T(1,128)S(1)}', space=vmem, size = 0x200, scoped, tag = 'scoped memory for tpu_custom_call.1']
  %s0 = inlined_call_operand.hbm [shape: f32[2,12288], index: 0, kind: input, shape index: {}]
  %s1 = inlined_call_operand.hbm [shape: bf16[1536,256], index: 1, kind: input, shape index: {}]
  %s2 = inlined_call_operand.vmem [shape: f32[1,256], index: 2, kind: input, shape index: {}]
  %s3 = inlined_call_operand.hbm [shape: bf16[256,256], index: 3, kind: input, shape index: {}]
  %s4 = inlined_call_operand.vmem [shape: f32[1,256], index: 4, kind: input, shape index: {}]
  %s5 = inlined_call_operand.hbm [shape: bf16[256,128], index: 5, kind: input, shape index: {}]
  %s6 = inlined_call_operand.vmem [shape: f32[1,128], index: 6, kind: input, shape index: {}]
  %s7 = inlined_call_operand.vmem [shape: f32[1,128], index: 7, kind: input, shape index: {}]
  %s8 = inlined_call_operand.<no memory space> [shape: f32[1,1], index: 8, kind: input, shape index: {}]
  %s9 = inlined_call_operand.vmem [shape: f32[2,1], index: 9, kind: output, shape index: {}]
  %s10 = sld [smem:[#allocation0]]
  $region62: #{tpu_custom_call.1} parent=0
    _
  %s12 = ssub.s32 1, %s10
  %s13 = scalar_select 0, %s12, %s10
  %v14 = vstv %s8
  %15 = vst [vmem:[#allocation2] sm:$0x1] %v14
  $region1: #{tpu_custom_call.1} parent=0
    #allocation3 [shape = 'u8[12288]{0}', space=vmem, size = 0x3000, scoped, tag = 'input window, operand 0, single buffered']
    #allocation4 [shape = 's32[1]{0}', space=sflag, size = 0x4, scoped, tag = 'scoped memory for tpu_custom_call.1']
    #allocation5 [shape = 'u8[786432]{0}', space=vmem, size = 0xc0000, scoped, tag = 'input window, operand 1, single buffered']
    #allocation6 [shape = 's32[1]{0}', space=sflag, size = 0x4, scoped, tag = 'scoped memory for tpu_custom_call.1']
    #allocation7 [shape = 'u8[131072]{0}', space=vmem, size = 0x20000, scoped, tag = 'input window, operand 3, single buffered']
    #allocation8 [shape = 'u8[65536]{0}', space=vmem, size = 0x10000, scoped, tag = 'input window, operand 5, single buffered']
    #allocation9 [shape = 's32[1]{0}', space=sflag, size = 0x4, scoped, tag = 'scoped memory for tpu_custom_call.1']
    %16 = vsyncpa [#allocation4], 0
    %17 = vsyncpa [#allocation6], 0
    %18 = vsyncpa [#allocation9], 0
    // Predicated region
    $region2: #{tpu_custom_call.1} parent=1 // pred_check
      _
    $region3: #{tpu_custom_call.1} parent=1 // pred_check_branch
      %20 = sbr.rel (0) target = $region5
    $region4: #{tpu_custom_call.1} parent=1 // pred_region
      %22 = vsyncadd [#allocation4], 0
      %s24 = sshll.u32 %s0, 4
      %s25 = int_to_ptr.hbm [resolvable:$true] %s24
      %s26 = sshll.u32 [#allocation3], 4
      %s27 = int_to_ptr.vmem [resolvable:$true] %s26
      %29 = dma.hbm_to_vmem [thread:$0]  %s25, 384, %s27, [#allocation4]
    $region5: #{tpu_custom_call.1} parent=1 // pred_fallthru
      _
    // Predicated region
    $region6: #{tpu_custom_call.1} parent=1 // pred_check
      _
    $region7: #{tpu_custom_call.1} parent=1 // pred_check_branch
      %31 = sbr.rel (0) target = $region9
    $region8: #{tpu_custom_call.1} parent=1 // pred_region
      %33 = vsyncadd [#allocation6], 0
      %s34 = sshll.u32 %s1, 4
      %s35 = int_to_ptr.hbm [resolvable:$true] %s34
      %s36 = sshll.u32 [#allocation5], 4
      %s37 = int_to_ptr.vmem [resolvable:$true] %s36
      %42 = dma.hbm_to_vmem [thread:$0]  %s35, 24576, %s37, [#allocation6], 128, 128, 8
    $region9: #{tpu_custom_call.1} parent=1 // pred_fallthru
      _
    // Predicated region
    $region10: #{tpu_custom_call.1} parent=1 // pred_check
      _
    $region11: #{tpu_custom_call.1} parent=1 // pred_check_branch
      %44 = sbr.rel (0) target = $region13
    $region12: #{tpu_custom_call.1} parent=1 // pred_region
      _
    $region13: #{tpu_custom_call.1} parent=1 // pred_fallthru
      _
    // Predicated region
    $region14: #{tpu_custom_call.1} parent=1 // pred_check
      _
    $region15: #{tpu_custom_call.1} parent=1 // pred_check_branch
      %46 = sbr.rel (0) target = $region17
    $region16: #{tpu_custom_call.1} parent=1 // pred_region
      %48 = vsyncadd [#allocation6], 0
      %s49 = sshll.u32 %s3, 4
      %s50 = int_to_ptr.hbm [resolvable:$true] %s49
      %s51 = sshll.u32 [#allocation7], 4
      %s52 = int_to_ptr.vmem [resolvable:$true] %s51
      %57 = dma.hbm_to_vmem [thread:$0]  %s50, 4096, %s52, [#allocation6], 128, 128, 8
    $region17: #{tpu_custom_call.1} parent=1 // pred_fallthru
      _
    // Predicated region
    $region18: #{tpu_custom_call.1} parent=1 // pred_check
      _
    $region19: #{tpu_custom_call.1} parent=1 // pred_check_branch
      %59 = sbr.rel (0) target = $region21
    $region20: #{tpu_custom_call.1} parent=1 // pred_region
      _
    $region21: #{tpu_custom_call.1} parent=1 // pred_fallthru
      _
    // Predicated region
    $region22: #{tpu_custom_call.1} parent=1 // pred_check
      _
    $region23: #{tpu_custom_call.1} parent=1 // pred_check_branch
      %61 = sbr.rel (0) target = $region25
    $region24: #{tpu_custom_call.1} parent=1 // pred_region
      %63 = vsyncadd [#allocation9], 0
      %s64 = sshll.u32 %s5, 4
      %s65 = int_to_ptr.hbm [resolvable:$true] %s64
      %s66 = sshll.u32 [#allocation8], 4
      %s67 = int_to_ptr.vmem [resolvable:$true] %s66
      %72 = dma.hbm_to_vmem [thread:$0]  %s65, 2048, %s67, [#allocation9], 64, 64, 4
    $region25: #{tpu_custom_call.1} parent=1 // pred_fallthru
      _
    // Predicated region
    $region26: #{tpu_custom_call.1} parent=1 // pred_check
      _
    $region27: #{tpu_custom_call.1} parent=1 // pred_check_branch
      %74 = sbr.rel (0) target = $region29
    $region28: #{tpu_custom_call.1} parent=1 // pred_region
      _
    $region29: #{tpu_custom_call.1} parent=1 // pred_fallthru
      _
    // Predicated region
    $region30: #{tpu_custom_call.1} parent=1 // pred_check
      _
    $region31: #{tpu_custom_call.1} parent=1 // pred_check_branch
      %76 = sbr.rel (0) target = $region33
    $region32: #{tpu_custom_call.1} parent=1 // pred_region
      _
    $region33: #{tpu_custom_call.1} parent=1 // pred_fallthru
      _
    // Predicated region
    $region34: #{tpu_custom_call.1} parent=1 // pred_check
      _
    $region35: #{tpu_custom_call.1} parent=1 // pred_check_branch
      %78 = sbr.rel (0) target = $region37
    $region36: #{tpu_custom_call.1} parent=1 // pred_region
      _
    $region37: #{tpu_custom_call.1} parent=1 // pred_fallthru
      _
    // Predicated region
    $region38: #{tpu_custom_call.1} parent=1 // pred_check
      _
    $region39: #{tpu_custom_call.1} parent=1 // pred_check_branch
      %80 = sbr.rel (0) target = $region41
    $region40: #{tpu_custom_call.1} parent=1 // pred_region
      %82 = dma.done [#allocation4], 384
    $region41: #{tpu_custom_call.1} parent=1 // pred_fallthru
      _
    // Predicated region
    $region42: #{tpu_custom_call.1} parent=1 // pred_check
      _
    $region43: #{tpu_custom_call.1} parent=1 // pred_check_branch
      %84 = sbr.rel (0) target = $region45
    $region44: #{tpu_custom_call.1} parent=1 // pred_region
      %86 = dma.done [#allocation6], 24576
    $region45: #{tpu_custom_call.1} parent=1 // pred_fallthru
      _
    // Predicated region
    $region46: #{tpu_custom_call.1} parent=1 // pred_check
      _
    $region47: #{tpu_custom_call.1} parent=1 // pred_check_branch
      %88 = sbr.rel (0) target = $region49
    $region48: #{tpu_custom_call.1} parent=1 // pred_region
      %90 = dma.done [#allocation6], 4096
    $region49: #{tpu_custom_call.1} parent=1 // pred_fallthru
      _
    // Predicated region
    $region50: #{tpu_custom_call.1} parent=1 // pred_check
      _
    $region51: #{tpu_custom_call.1} parent=1 // pred_check_branch
      %92 = sbr.rel (0) target = $region53
    $region52: #{tpu_custom_call.1} parent=1 // pred_region
      %94 = dma.done [#allocation9], 2048
    $region53: #{tpu_custom_call.1} parent=1 // pred_fallthru
      _
    %v95 = vld [vmem:[#allocation3] sm:$0xff]
    %v96 = vld [vmem:[#allocation3 + $0x8] sm:$0xff]
    %v97 = vld [vmem:[#allocation3 + $0x10] sm:$0xff]
    %101 = vst [vmem:[#allocation1] ss:$4 sm:$0xff] %v95
    %s102 = scalar_lea.vmem [#allocation1], 32
    %103 = vst [vmem:[%s102] ss:$4 sm:$0xff] %v96
    %v104 = vld.sshfl [vmem:[#allocation1] sm:$0xff pattern:$0x73625140]
    %v105 = vld.sshfl [vmem:[#allocation1 + $0x8] sm:$0xff pattern:$0x73625140]
    %v106 = vld.sshfl [vmem:[#allocation1 + $0x10] sm:$0xff pattern:$0x73625140]
    %v107 = vld.sshfl [vmem:[#allocation1 + $0x18] sm:$0xff pattern:$0x73625140]
    %v108 = vld.sshfl [vmem:[#allocation1 + $0x20] sm:$0xff pattern:$0x73625140]
    %v109 = vld.sshfl [vmem:[#allocation1 + $0x28] sm:$0xff pattern:$0x73625140]
    %v110 = vld.sshfl [vmem:[#allocation1 + $0x30] sm:$0xff pattern:$0x73625140]
    %v111 = vld.sshfl [vmem:[#allocation1 + $0x38] sm:$0xff pattern:$0x73625140]
    %112 = vst [vmem:[#allocation1] ss:$4 sm:$0xff] %v97
    %v113 = vld.sshfl [vmem:[#allocation1] sm:$0xff pattern:$0x73625140]
    %v114 = vld.sshfl [vmem:[#allocation1 + $0x8] sm:$0xff pattern:$0x73625140]
    %v115 = vld.sshfl [vmem:[#allocation1 + $0x10] sm:$0xff pattern:$0x73625140]
    %v116 = vld.sshfl [vmem:[#allocation1 + $0x18] sm:$0xff pattern:$0x73625140]
    %v129 = vpack.c.bf16 %v104, %v104
    %v130 = vpack.c.bf16 %v105, %v105
    %v131 = vpack.c.bf16 %v106, %v106
    %v132 = vpack.c.bf16 %v107, %v107
    %v133 = vpack.c.bf16 %v108, %v108
    %v134 = vpack.c.bf16 %v109, %v109
    %v135 = vpack.c.bf16 %v110, %v110
    %v136 = vpack.c.bf16 %v111, %v111
    %v137 = vpack.c.bf16 %v113, %v113
    %v138 = vpack.c.bf16 %v114, %v114
    %v139 = vpack.c.bf16 %v115, %v115
    %v140 = vpack.c.bf16 %v116, %v116
    %v141 = vld [vmem:[#allocation5] sm:$0xff]
    %v142 = vld [vmem:[#allocation5 + $0x8] sm:$0xff]
    %v143 = vld [vmem:[#allocation5 + $0x10] sm:$0xff]
    %v144 = vld [vmem:[#allocation5 + $0x18] sm:$0xff]
    %v145 = vld [vmem:[#allocation5 + $0x20] sm:$0xff]
    %v146 = vld [vmem:[#allocation5 + $0x28] sm:$0xff]
    %v147 = vld [vmem:[#allocation5 + $0x30] sm:$0xff]
    %v148 = vld [vmem:[#allocation5 + $0x38] sm:$0xff]
    %v149 = vld [vmem:[#allocation5 + $0x40] sm:$0xff]
    %v150 = vld [vmem:[#allocation5 + $0x48] sm:$0xff]
    %v151 = vld [vmem:[#allocation5 + $0x50] sm:$0xff]
    %v152 = vld [vmem:[#allocation5 + $0x58] sm:$0xff]
    %v153 = vld [vmem:[#allocation5 + $0x60] sm:$0xff]
    %v154 = vld [vmem:[#allocation5 + $0x68] sm:$0xff]
    %v155 = vld [vmem:[#allocation5 + $0x70] sm:$0xff]
    %v156 = vld [vmem:[#allocation5 + $0x78] sm:$0xff]
    %v157 = vld [vmem:[#allocation5 + $0x80] sm:$0xff]
    %v158 = vld [vmem:[#allocation5 + $0x88] sm:$0xff]
    %v159 = vld [vmem:[#allocation5 + $0x90] sm:$0xff]
    %v160 = vld [vmem:[#allocation5 + $0x98] sm:$0xff]
    %v161 = vld [vmem:[#allocation5 + $0xa0] sm:$0xff]
    %v162 = vld [vmem:[#allocation5 + $0xa8] sm:$0xff]
    %v163 = vld [vmem:[#allocation5 + $0xb0] sm:$0xff]
    %v164 = vld [vmem:[#allocation5 + $0xb8] sm:$0xff]
    %v165 = vld [vmem:[#allocation5 + $0xc0] sm:$0xff]
    %v166 = vld [vmem:[#allocation5 + $0xc8] sm:$0xff]
    %v167 = vld [vmem:[#allocation5 + $0xd0] sm:$0xff]
    %v168 = vld [vmem:[#allocation5 + $0xd8] sm:$0xff]
    %v169 = vld [vmem:[#allocation5 + $0xe0] sm:$0xff]
    %v170 = vld [vmem:[#allocation5 + $0xe8] sm:$0xff]
    %v171 = vld [vmem:[#allocation5 + $0xf0] sm:$0xff]
    %v172 = vld [vmem:[#allocation5 + $0xf8] sm:$0xff]
    %v173 = vld [vmem:[#allocation5 + $0x100] sm:$0xff]
    %v174 = vld [vmem:[#allocation5 + $0x108] sm:$0xff]
    %v175 = vld [vmem:[#allocation5 + $0x110] sm:$0xff]
    %v176 = vld [vmem:[#allocation5 + $0x118] sm:$0xff]
    %v177 = vld [vmem:[#allocation5 + $0x120] sm:$0xff]
    %v178 = vld [vmem:[#allocation5 + $0x128] sm:$0xff]
    %v179 = vld [vmem:[#allocation5 + $0x130] sm:$0xff]
    %v180 = vld [vmem:[#allocation5 + $0x138] sm:$0xff]
    %v181 = vld [vmem:[#allocation5 + $0x140] sm:$0xff]
    %v182 = vld [vmem:[#allocation5 + $0x148] sm:$0xff]
    %v183 = vld [vmem:[#allocation5 + $0x150] sm:$0xff]
    %v184 = vld [vmem:[#allocation5 + $0x158] sm:$0xff]
    %v185 = vld [vmem:[#allocation5 + $0x160] sm:$0xff]
    %v186 = vld [vmem:[#allocation5 + $0x168] sm:$0xff]
    %v187 = vld [vmem:[#allocation5 + $0x170] sm:$0xff]
    %v188 = vld [vmem:[#allocation5 + $0x178] sm:$0xff]
    %v189 = vld [vmem:[#allocation5 + $0x180] sm:$0xff]
    %v190 = vld [vmem:[#allocation5 + $0x188] sm:$0xff]
    %v191 = vld [vmem:[#allocation5 + $0x190] sm:$0xff]
    %v192 = vld [vmem:[#allocation5 + $0x198] sm:$0xff]
    %v193 = vld [vmem:[#allocation5 + $0x1a0] sm:$0xff]
    %v194 = vld [vmem:[#allocation5 + $0x1a8] sm:$0xff]
    %v195 = vld [vmem:[#allocation5 + $0x1b0] sm:$0xff]
    %v196 = vld [vmem:[#allocation5 + $0x1b8] sm:$0xff]
    %v197 = vld [vmem:[#allocation5 + $0x1c0] sm:$0xff]
    %v198 = vld [vmem:[#allocation5 + $0x1c8] sm:$0xff]
    %v199 = vld [vmem:[#allocation5 + $0x1d0] sm:$0xff]
    %v200 = vld [vmem:[#allocation5 + $0x1d8] sm:$0xff]
    %v201 = vld [vmem:[#allocation5 + $0x1e0] sm:$0xff]
    %v202 = vld [vmem:[#allocation5 + $0x1e8] sm:$0xff]
    %v203 = vld [vmem:[#allocation5 + $0x1f0] sm:$0xff]
    %v204 = vld [vmem:[#allocation5 + $0x1f8] sm:$0xff]
    %v205 = vld [vmem:[#allocation5 + $0x200] sm:$0xff]
    %v206 = vld [vmem:[#allocation5 + $0x208] sm:$0xff]
    %v207 = vld [vmem:[#allocation5 + $0x210] sm:$0xff]
    %v208 = vld [vmem:[#allocation5 + $0x218] sm:$0xff]
    %v209 = vld [vmem:[#allocation5 + $0x220] sm:$0xff]
    %v210 = vld [vmem:[#allocation5 + $0x228] sm:$0xff]
    %v211 = vld [vmem:[#allocation5 + $0x230] sm:$0xff]
    %v212 = vld [vmem:[#allocation5 + $0x238] sm:$0xff]
    %v213 = vld [vmem:[#allocation5 + $0x240] sm:$0xff]
    %v214 = vld [vmem:[#allocation5 + $0x248] sm:$0xff]
    %v215 = vld [vmem:[#allocation5 + $0x250] sm:$0xff]
    %v216 = vld [vmem:[#allocation5 + $0x258] sm:$0xff]
    %v217 = vld [vmem:[#allocation5 + $0x260] sm:$0xff]
    %v218 = vld [vmem:[#allocation5 + $0x268] sm:$0xff]
    %v219 = vld [vmem:[#allocation5 + $0x270] sm:$0xff]
    %v220 = vld [vmem:[#allocation5 + $0x278] sm:$0xff]
    %v221 = vld [vmem:[#allocation5 + $0x280] sm:$0xff]
    %v222 = vld [vmem:[#allocation5 + $0x288] sm:$0xff]
    %v223 = vld [vmem:[#allocation5 + $0x290] sm:$0xff]
    %v224 = vld [vmem:[#allocation5 + $0x298] sm:$0xff]
    %v225 = vld [vmem:[#allocation5 + $0x2a0] sm:$0xff]
    %v226 = vld [vmem:[#allocation5 + $0x2a8] sm:$0xff]
    %v227 = vld [vmem:[#allocation5 + $0x2b0] sm:$0xff]
    %v228 = vld [vmem:[#allocation5 + $0x2b8] sm:$0xff]
    %v229 = vld [vmem:[#allocation5 + $0x2c0] sm:$0xff]
    %v230 = vld [vmem:[#allocation5 + $0x2c8] sm:$0xff]
    %v231 = vld [vmem:[#allocation5 + $0x2d0] sm:$0xff]
    %v232 = vld [vmem:[#allocation5 + $0x2d8] sm:$0xff]
    %v233 = vld [vmem:[#allocation5 + $0x2e0] sm:$0xff]
    %v234 = vld [vmem:[#allocation5 + $0x2e8] sm:$0xff]
    %v235 = vld [vmem:[#allocation5 + $0x2f0] sm:$0xff]
    %v236 = vld [vmem:[#allocation5 + $0x2f8] sm:$0xff]
    %v237 = vld [vmem:[#allocation5 + $0x300] sm:$0xff]
    %v238 = vld [vmem:[#allocation5 + $0x308] sm:$0xff]
    %v239 = vld [vmem:[#allocation5 + $0x310] sm:$0xff]
    %v240 = vld [vmem:[#allocation5 + $0x318] sm:$0xff]
    %v241 = vld [vmem:[#allocation5 + $0x320] sm:$0xff]
    %v242 = vld [vmem:[#allocation5 + $0x328] sm:$0xff]
    %v243 = vld [vmem:[#allocation5 + $0x330] sm:$0xff]
    %v244 = vld [vmem:[#allocation5 + $0x338] sm:$0xff]
    %v245 = vld [vmem:[#allocation5 + $0x340] sm:$0xff]
    %v246 = vld [vmem:[#allocation5 + $0x348] sm:$0xff]
    %v247 = vld [vmem:[#allocation5 + $0x350] sm:$0xff]
    %v248 = vld [vmem:[#allocation5 + $0x358] sm:$0xff]
    %v249 = vld [vmem:[#allocation5 + $0x360] sm:$0xff]
    %v250 = vld [vmem:[#allocation5 + $0x368] sm:$0xff]
    %v251 = vld [vmem:[#allocation5 + $0x370] sm:$0xff]
    %v252 = vld [vmem:[#allocation5 + $0x378] sm:$0xff]
    %v253 = vld [vmem:[#allocation5 + $0x380] sm:$0xff]
    %v254 = vld [vmem:[#allocation5 + $0x388] sm:$0xff]
    %v255 = vld [vmem:[#allocation5 + $0x390] sm:$0xff]
    %v256 = vld [vmem:[#allocation5 + $0x398] sm:$0xff]
    %v257 = vld [vmem:[#allocation5 + $0x3a0] sm:$0xff]
    %v258 = vld [vmem:[#allocation5 + $0x3a8] sm:$0xff]
    %v259 = vld [vmem:[#allocation5 + $0x3b0] sm:$0xff]
    %v260 = vld [vmem:[#allocation5 + $0x3b8] sm:$0xff]
    %v261 = vld [vmem:[#allocation5 + $0x3c0] sm:$0xff]
    %v262 = vld [vmem:[#allocation5 + $0x3c8] sm:$0xff]
    %v263 = vld [vmem:[#allocation5 + $0x3d0] sm:$0xff]
    %v264 = vld [vmem:[#allocation5 + $0x3d8] sm:$0xff]
    %v265 = vld [vmem:[#allocation5 + $0x3e0] sm:$0xff]
    %v266 = vld [vmem:[#allocation5 + $0x3e8] sm:$0xff]
    %v267 = vld [vmem:[#allocation5 + $0x3f0] sm:$0xff]
    %v268 = vld [vmem:[#allocation5 + $0x3f8] sm:$0xff]
    %v269 = vld [vmem:[#allocation5 + $0x400] sm:$0xff]
    %v270 = vld [vmem:[#allocation5 + $0x408] sm:$0xff]
    %v271 = vld [vmem:[#allocation5 + $0x410] sm:$0xff]
    %v272 = vld [vmem:[#allocation5 + $0x418] sm:$0xff]
    %v273 = vld [vmem:[#allocation5 + $0x420] sm:$0xff]
    %v274 = vld [vmem:[#allocation5 + $0x428] sm:$0xff]
    %v275 = vld [vmem:[#allocation5 + $0x430] sm:$0xff]
    %v276 = vld [vmem:[#allocation5 + $0x438] sm:$0xff]
    %v277 = vld [vmem:[#allocation5 + $0x440] sm:$0xff]
    %v278 = vld [vmem:[#allocation5 + $0x448] sm:$0xff]
    %v279 = vld [vmem:[#allocation5 + $0x450] sm:$0xff]
    %v280 = vld [vmem:[#allocation5 + $0x458] sm:$0xff]
    %v281 = vld [vmem:[#allocation5 + $0x460] sm:$0xff]
    %v282 = vld [vmem:[#allocation5 + $0x468] sm:$0xff]
    %v283 = vld [vmem:[#allocation5 + $0x470] sm:$0xff]
    %v284 = vld [vmem:[#allocation5 + $0x478] sm:$0xff]
    %v285 = vld [vmem:[#allocation5 + $0x480] sm:$0xff]
    %v286 = vld [vmem:[#allocation5 + $0x488] sm:$0xff]
    %v287 = vld [vmem:[#allocation5 + $0x490] sm:$0xff]
    %v288 = vld [vmem:[#allocation5 + $0x498] sm:$0xff]
    %v289 = vld [vmem:[#allocation5 + $0x4a0] sm:$0xff]
    %v290 = vld [vmem:[#allocation5 + $0x4a8] sm:$0xff]
    %v291 = vld [vmem:[#allocation5 + $0x4b0] sm:$0xff]
    %v292 = vld [vmem:[#allocation5 + $0x4b8] sm:$0xff]
    %v293 = vld [vmem:[#allocation5 + $0x4c0] sm:$0xff]
    %v294 = vld [vmem:[#allocation5 + $0x4c8] sm:$0xff]
    %v295 = vld [vmem:[#allocation5 + $0x4d0] sm:$0xff]
    %v296 = vld [vmem:[#allocation5 + $0x4d8] sm:$0xff]
    %v297 = vld [vmem:[#allocation5 + $0x4e0] sm:$0xff]
    %v298 = vld [vmem:[#allocation5 + $0x4e8] sm:$0xff]
    %v299 = vld [vmem:[#allocation5 + $0x4f0] sm:$0xff]
    %v300 = vld [vmem:[#allocation5 + $0x4f8] sm:$0xff]
    %v301 = vld [vmem:[#allocation5 + $0x500] sm:$0xff]
    %v302 = vld [vmem:[#allocation5 + $0x508] sm:$0xff]
    %v303 = vld [vmem:[#allocation5 + $0x510] sm:$0xff]
    %v304 = vld [vmem:[#allocation5 + $0x518] sm:$0xff]
    %v305 = vld [vmem:[#allocation5 + $0x520] sm:$0xff]
    %v306 = vld [vmem:[#allocation5 + $0x528] sm:$0xff]
    %v307 = vld [vmem:[#allocation5 + $0x530] sm:$0xff]
    %v308 = vld [vmem:[#allocation5 + $0x538] sm:$0xff]
    %v309 = vld [vmem:[#allocation5 + $0x540] sm:$0xff]
    %v310 = vld [vmem:[#allocation5 + $0x548] sm:$0xff]
    %v311 = vld [vmem:[#allocation5 + $0x550] sm:$0xff]
    %v312 = vld [vmem:[#allocation5 + $0x558] sm:$0xff]
    %v313 = vld [vmem:[#allocation5 + $0x560] sm:$0xff]
    %v314 = vld [vmem:[#allocation5 + $0x568] sm:$0xff]
    %v315 = vld [vmem:[#allocation5 + $0x570] sm:$0xff]
    %v316 = vld [vmem:[#allocation5 + $0x578] sm:$0xff]
    %v317 = vld [vmem:[#allocation5 + $0x580] sm:$0xff]
    %v318 = vld [vmem:[#allocation5 + $0x588] sm:$0xff]
    %v319 = vld [vmem:[#allocation5 + $0x590] sm:$0xff]
    %v320 = vld [vmem:[#allocation5 + $0x598] sm:$0xff]
    %v321 = vld [vmem:[#allocation5 + $0x5a0] sm:$0xff]
    %v322 = vld [vmem:[#allocation5 + $0x5a8] sm:$0xff]
    %v323 = vld [vmem:[#allocation5 + $0x5b0] sm:$0xff]
    %v324 = vld [vmem:[#allocation5 + $0x5b8] sm:$0xff]
    %v325 = vld [vmem:[#allocation5 + $0x5c0] sm:$0xff]
    %v326 = vld [vmem:[#allocation5 + $0x5c8] sm:$0xff]
    %v327 = vld [vmem:[#allocation5 + $0x5d0] sm:$0xff]
    %v328 = vld [vmem:[#allocation5 + $0x5d8] sm:$0xff]
    %v329 = vld [vmem:[#allocation5 + $0x5e0] sm:$0xff]
    %v330 = vld [vmem:[#allocation5 + $0x5e8] sm:$0xff]
    %v331 = vld [vmem:[#allocation5 + $0x5f0] sm:$0xff]
    %v332 = vld [vmem:[#allocation5 + $0x5f8] sm:$0xff]
    %v333 = vld [vmem:[%s2] sm:$0x3]
    %v335 = vperm.slane %v333, 0
    %v336 = vperm.slane %v333, 1
    %v531 = vunpack.c.l.b16 %v141
    %v532 = vunpack.c.h.b16 %v141
    %v533 = vunpack.c.l.b16 %v142
    %v534 = vunpack.c.h.b16 %v142
    %v535 = vunpack.c.l.b16 %v143
    %v536 = vunpack.c.h.b16 %v143
    %v537 = vunpack.c.l.b16 %v144
    %v538 = vunpack.c.h.b16 %v144
    %v539 = vunpack.c.l.b16 %v145
    %v540 = vunpack.c.h.b16 %v145
    %v541 = vunpack.c.l.b16 %v146
    %v542 = vunpack.c.h.b16 %v146
    %v543 = vunpack.c.l.b16 %v147
    %v544 = vunpack.c.h.b16 %v147
    %v545 = vunpack.c.l.b16 %v148
    %v546 = vunpack.c.h.b16 %v148
    %v547 = vunpack.c.l.b16 %v149
    %v548 = vunpack.c.h.b16 %v149
    %v549 = vunpack.c.l.b16 %v150
    %v550 = vunpack.c.h.b16 %v150
    %v551 = vunpack.c.l.b16 %v151
    %v552 = vunpack.c.h.b16 %v151
    %v553 = vunpack.c.l.b16 %v152
    %v554 = vunpack.c.h.b16 %v152
    %v555 = vunpack.c.l.b16 %v153
    %v556 = vunpack.c.h.b16 %v153
    %v557 = vunpack.c.l.b16 %v154
    %v558 = vunpack.c.h.b16 %v154
    %v559 = vunpack.c.l.b16 %v155
    %v560 = vunpack.c.h.b16 %v155
    %v561 = vunpack.c.l.b16 %v156
    %v562 = vunpack.c.h.b16 %v156
    %v563 = vunpack.c.l.b16 %v157
    %v564 = vunpack.c.h.b16 %v157
    %v565 = vunpack.c.l.b16 %v158
    %v566 = vunpack.c.h.b16 %v158
    %v567 = vunpack.c.l.b16 %v159
    %v568 = vunpack.c.h.b16 %v159
    %v569 = vunpack.c.l.b16 %v160
    %v570 = vunpack.c.h.b16 %v160
    %v571 = vunpack.c.l.b16 %v161
    %v572 = vunpack.c.h.b16 %v161
    %v573 = vunpack.c.l.b16 %v162
    %v574 = vunpack.c.h.b16 %v162
    %v575 = vunpack.c.l.b16 %v163
    %v576 = vunpack.c.h.b16 %v163
    %v577 = vunpack.c.l.b16 %v164
    %v578 = vunpack.c.h.b16 %v164
    %v579 = vunpack.c.l.b16 %v165
    %v580 = vunpack.c.h.b16 %v165
    %v581 = vunpack.c.l.b16 %v166
    %v582 = vunpack.c.h.b16 %v166
    %v583 = vunpack.c.l.b16 %v167
    %v584 = vunpack.c.h.b16 %v167
    %v585 = vunpack.c.l.b16 %v168
    %v586 = vunpack.c.h.b16 %v168
    %v587 = vunpack.c.l.b16 %v169
    %v588 = vunpack.c.h.b16 %v169
    %v589 = vunpack.c.l.b16 %v170
    %v590 = vunpack.c.h.b16 %v170
    %v591 = vunpack.c.l.b16 %v171
    %v592 = vunpack.c.h.b16 %v171
    %v593 = vunpack.c.l.b16 %v172
    %v594 = vunpack.c.h.b16 %v172
    %v595 = vunpack.c.l.b16 %v173
    %v596 = vunpack.c.h.b16 %v173
    %v597 = vunpack.c.l.b16 %v174
    %v598 = vunpack.c.h.b16 %v174
    %v599 = vunpack.c.l.b16 %v175
    %v600 = vunpack.c.h.b16 %v175
    %v601 = vunpack.c.l.b16 %v176
    %v602 = vunpack.c.h.b16 %v176
    %v603 = vunpack.c.l.b16 %v177
    %v604 = vunpack.c.h.b16 %v177
    %v605 = vunpack.c.l.b16 %v178
    %v606 = vunpack.c.h.b16 %v178
    %v607 = vunpack.c.l.b16 %v179
    %v608 = vunpack.c.h.b16 %v179
    %v609 = vunpack.c.l.b16 %v180
    %v610 = vunpack.c.h.b16 %v180
    %v611 = vunpack.c.l.b16 %v181
    %v612 = vunpack.c.h.b16 %v181
    %v613 = vunpack.c.l.b16 %v182
    %v614 = vunpack.c.h.b16 %v182
    %v615 = vunpack.c.l.b16 %v183
    %v616 = vunpack.c.h.b16 %v183
    %v617 = vunpack.c.l.b16 %v184
    %v618 = vunpack.c.h.b16 %v184
    %v619 = vunpack.c.l.b16 %v185
    %v620 = vunpack.c.h.b16 %v185
    %v621 = vunpack.c.l.b16 %v186
    %v622 = vunpack.c.h.b16 %v186
    %v623 = vunpack.c.l.b16 %v187
    %v624 = vunpack.c.h.b16 %v187
    %v625 = vunpack.c.l.b16 %v188
    %v626 = vunpack.c.h.b16 %v188
    %v627 = vunpack.c.l.b16 %v189
    %v628 = vunpack.c.h.b16 %v189
    %v629 = vunpack.c.l.b16 %v190
    %v630 = vunpack.c.h.b16 %v190
    %v631 = vunpack.c.l.b16 %v191
    %v632 = vunpack.c.h.b16 %v191
    %v633 = vunpack.c.l.b16 %v192
    %v634 = vunpack.c.h.b16 %v192
    %v635 = vunpack.c.l.b16 %v193
    %v636 = vunpack.c.h.b16 %v193
    %v637 = vunpack.c.l.b16 %v194
    %v638 = vunpack.c.h.b16 %v194
    %v639 = vunpack.c.l.b16 %v195
    %v640 = vunpack.c.h.b16 %v195
    %v641 = vunpack.c.l.b16 %v196
    %v642 = vunpack.c.h.b16 %v196
    %v643 = vunpack.c.l.b16 %v197
    %v644 = vunpack.c.h.b16 %v197
    %v645 = vunpack.c.l.b16 %v198
    %v646 = vunpack.c.h.b16 %v198
    %v647 = vunpack.c.l.b16 %v199
    %v648 = vunpack.c.h.b16 %v199
    %v649 = vunpack.c.l.b16 %v200
    %v650 = vunpack.c.h.b16 %v200
    %v651 = vunpack.c.l.b16 %v201
    %v652 = vunpack.c.h.b16 %v201
    %v653 = vunpack.c.l.b16 %v202
    %v654 = vunpack.c.h.b16 %v202
    %v655 = vunpack.c.l.b16 %v203
    %v656 = vunpack.c.h.b16 %v203
    %v657 = vunpack.c.l.b16 %v204
    %v658 = vunpack.c.h.b16 %v204
    %v659 = vunpack.c.l.b16 %v205
    %v660 = vunpack.c.h.b16 %v205
    %v661 = vunpack.c.l.b16 %v206
    %v662 = vunpack.c.h.b16 %v206
    %v663 = vunpack.c.l.b16 %v207
    %v664 = vunpack.c.h.b16 %v207
    %v665 = vunpack.c.l.b16 %v208
    %v666 = vunpack.c.h.b16 %v208
    %v667 = vunpack.c.l.b16 %v209
    %v668 = vunpack.c.h.b16 %v209
    %v669 = vunpack.c.l.b16 %v210
    %v670 = vunpack.c.h.b16 %v210
    %v671 = vunpack.c.l.b16 %v211
    %v672 = vunpack.c.h.b16 %v211
    %v673 = vunpack.c.l.b16 %v212
    %v674 = vunpack.c.h.b16 %v212
    %v675 = vunpack.c.l.b16 %v213
    %v676 = vunpack.c.h.b16 %v213
    %v677 = vunpack.c.l.b16 %v214
    %v678 = vunpack.c.h.b16 %v214
    %v679 = vunpack.c.l.b16 %v215
    %v680 = vunpack.c.h.b16 %v215
    %v681 = vunpack.c.l.b16 %v216
    %v682 = vunpack.c.h.b16 %v216
    %v683 = vunpack.c.l.b16 %v217
    %v684 = vunpack.c.h.b16 %v217
    %v685 = vunpack.c.l.b16 %v218
    %v686 = vunpack.c.h.b16 %v218
    %v687 = vunpack.c.l.b16 %v219
    %v688 = vunpack.c.h.b16 %v219
    %v689 = vunpack.c.l.b16 %v220
    %v690 = vunpack.c.h.b16 %v220
    %v691 = vunpack.c.l.b16 %v221
    %v692 = vunpack.c.h.b16 %v221
    %v693 = vunpack.c.l.b16 %v222
    %v694 = vunpack.c.h.b16 %v222
    %v695 = vunpack.c.l.b16 %v223
    %v696 = vunpack.c.h.b16 %v223
    %v697 = vunpack.c.l.b16 %v224
    %v698 = vunpack.c.h.b16 %v224
    %v699 = vunpack.c.l.b16 %v225
    %v700 = vunpack.c.h.b16 %v225
    %v701 = vunpack.c.l.b16 %v226
    %v702 = vunpack.c.h.b16 %v226
    %v703 = vunpack.c.l.b16 %v227
    %v704 = vunpack.c.h.b16 %v227
    %v705 = vunpack.c.l.b16 %v228
    %v706 = vunpack.c.h.b16 %v228
    %v707 = vunpack.c.l.b16 %v229
    %v708 = vunpack.c.h.b16 %v229
    %v709 = vunpack.c.l.b16 %v230
    %v710 = vunpack.c.h.b16 %v230
    %v711 = vunpack.c.l.b16 %v231
    %v712 = vunpack.c.h.b16 %v231
    %v713 = vunpack.c.l.b16 %v232
    %v714 = vunpack.c.h.b16 %v232
    %v715 = vunpack.c.l.b16 %v233
    %v716 = vunpack.c.h.b16 %v233
    %v717 = vunpack.c.l.b16 %v234
    %v718 = vunpack.c.h.b16 %v234
    %v719 = vunpack.c.l.b16 %v235
    %v720 = vunpack.c.h.b16 %v235
    %v721 = vunpack.c.l.b16 %v236
    %v722 = vunpack.c.h.b16 %v236
    %v723 = vunpack.c.l.b16 %v237
    %v724 = vunpack.c.h.b16 %v237
    %v725 = vunpack.c.l.b16 %v238
    %v726 = vunpack.c.h.b16 %v238
    %v727 = vunpack.c.l.b16 %v239
    %v728 = vunpack.c.h.b16 %v239
    %v729 = vunpack.c.l.b16 %v240
    %v730 = vunpack.c.h.b16 %v240
    %v731 = vunpack.c.l.b16 %v241
    %v732 = vunpack.c.h.b16 %v241
    %v733 = vunpack.c.l.b16 %v242
    %v734 = vunpack.c.h.b16 %v242
    %v735 = vunpack.c.l.b16 %v243
    %v736 = vunpack.c.h.b16 %v243
    %v737 = vunpack.c.l.b16 %v244
    %v738 = vunpack.c.h.b16 %v244
    %v739 = vunpack.c.l.b16 %v245
    %v740 = vunpack.c.h.b16 %v245
    %v741 = vunpack.c.l.b16 %v246
    %v742 = vunpack.c.h.b16 %v246
    %v743 = vunpack.c.l.b16 %v247
    %v744 = vunpack.c.h.b16 %v247
    %v745 = vunpack.c.l.b16 %v248
    %v746 = vunpack.c.h.b16 %v248
    %v747 = vunpack.c.l.b16 %v249
    %v748 = vunpack.c.h.b16 %v249
    %v749 = vunpack.c.l.b16 %v250
    %v750 = vunpack.c.h.b16 %v250
    %v751 = vunpack.c.l.b16 %v251
    %v752 = vunpack.c.h.b16 %v251
    %v753 = vunpack.c.l.b16 %v252
    %v754 = vunpack.c.h.b16 %v252
    %v755 = vunpack.c.l.b16 %v253
    %v756 = vunpack.c.h.b16 %v253
    %v757 = vunpack.c.l.b16 %v254
    %v758 = vunpack.c.h.b16 %v254
    %v759 = vunpack.c.l.b16 %v255
    %v760 = vunpack.c.h.b16 %v255
    %v761 = vunpack.c.l.b16 %v256
    %v762 = vunpack.c.h.b16 %v256
    %v763 = vunpack.c.l.b16 %v257
    %v764 = vunpack.c.h.b16 %v257
    %v765 = vunpack.c.l.b16 %v258
    %v766 = vunpack.c.h.b16 %v258
    %v767 = vunpack.c.l.b16 %v259
    %v768 = vunpack.c.h.b16 %v259
    %v769 = vunpack.c.l.b16 %v260
    %v770 = vunpack.c.h.b16 %v260
    %v771 = vunpack.c.l.b16 %v261
    %v772 = vunpack.c.h.b16 %v261
    %v773 = vunpack.c.l.b16 %v262
    %v774 = vunpack.c.h.b16 %v262
    %v775 = vunpack.c.l.b16 %v263
    %v776 = vunpack.c.h.b16 %v263
    %v777 = vunpack.c.l.b16 %v264
    %v778 = vunpack.c.h.b16 %v264
    %v779 = vunpack.c.l.b16 %v265
    %v780 = vunpack.c.h.b16 %v265
    %v781 = vunpack.c.l.b16 %v266
    %v782 = vunpack.c.h.b16 %v266
    %v783 = vunpack.c.l.b16 %v267
    %v784 = vunpack.c.h.b16 %v267
    %v785 = vunpack.c.l.b16 %v268
    %v786 = vunpack.c.h.b16 %v268
    %v787 = vunpack.c.l.b16 %v269
    %v788 = vunpack.c.h.b16 %v269
    %v789 = vunpack.c.l.b16 %v270
    %v790 = vunpack.c.h.b16 %v270
    %v791 = vunpack.c.l.b16 %v271
    %v792 = vunpack.c.h.b16 %v271
    %v793 = vunpack.c.l.b16 %v272
    %v794 = vunpack.c.h.b16 %v272
    %v795 = vunpack.c.l.b16 %v273
    %v796 = vunpack.c.h.b16 %v273
    %v797 = vunpack.c.l.b16 %v274
    %v798 = vunpack.c.h.b16 %v274
    %v799 = vunpack.c.l.b16 %v275
    %v800 = vunpack.c.h.b16 %v275
    %v801 = vunpack.c.l.b16 %v276
    %v802 = vunpack.c.h.b16 %v276
    %v803 = vunpack.c.l.b16 %v277
    %v804 = vunpack.c.h.b16 %v277
    %v805 = vunpack.c.l.b16 %v278
    %v806 = vunpack.c.h.b16 %v278
    %v807 = vunpack.c.l.b16 %v279
    %v808 = vunpack.c.h.b16 %v279
    %v809 = vunpack.c.l.b16 %v280
    %v810 = vunpack.c.h.b16 %v280
    %v811 = vunpack.c.l.b16 %v281
    %v812 = vunpack.c.h.b16 %v281
    %v813 = vunpack.c.l.b16 %v282
    %v814 = vunpack.c.h.b16 %v282
    %v815 = vunpack.c.l.b16 %v283
    %v816 = vunpack.c.h.b16 %v283
    %v817 = vunpack.c.l.b16 %v284
    %v818 = vunpack.c.h.b16 %v284
    %v819 = vunpack.c.l.b16 %v285
    %v820 = vunpack.c.h.b16 %v285
    %v821 = vunpack.c.l.b16 %v286
    %v822 = vunpack.c.h.b16 %v286
    %v823 = vunpack.c.l.b16 %v287
    %v824 = vunpack.c.h.b16 %v287
    %v825 = vunpack.c.l.b16 %v288
    %v826 = vunpack.c.h.b16 %v288
    %v827 = vunpack.c.l.b16 %v289
    %v828 = vunpack.c.h.b16 %v289
    %v829 = vunpack.c.l.b16 %v290
    %v830 = vunpack.c.h.b16 %v290
    %v831 = vunpack.c.l.b16 %v291
    %v832 = vunpack.c.h.b16 %v291
    %v833 = vunpack.c.l.b16 %v292
    %v834 = vunpack.c.h.b16 %v292
    %v835 = vunpack.c.l.b16 %v293
    %v836 = vunpack.c.h.b16 %v293
    %v837 = vunpack.c.l.b16 %v294
    %v838 = vunpack.c.h.b16 %v294
    %v839 = vunpack.c.l.b16 %v295
    %v840 = vunpack.c.h.b16 %v295
    %v841 = vunpack.c.l.b16 %v296
    %v842 = vunpack.c.h.b16 %v296
    %v843 = vunpack.c.l.b16 %v297
    %v844 = vunpack.c.h.b16 %v297
    %v845 = vunpack.c.l.b16 %v298
    %v846 = vunpack.c.h.b16 %v298
    %v847 = vunpack.c.l.b16 %v299
    %v848 = vunpack.c.h.b16 %v299
    %v849 = vunpack.c.l.b16 %v300
    %v850 = vunpack.c.h.b16 %v300
    %v851 = vunpack.c.l.b16 %v301
    %v852 = vunpack.c.h.b16 %v301
    %v853 = vunpack.c.l.b16 %v302
    %v854 = vunpack.c.h.b16 %v302
    %v855 = vunpack.c.l.b16 %v303
    %v856 = vunpack.c.h.b16 %v303
    %v857 = vunpack.c.l.b16 %v304
    %v858 = vunpack.c.h.b16 %v304
    %v859 = vunpack.c.l.b16 %v305
    %v860 = vunpack.c.h.b16 %v305
    %v861 = vunpack.c.l.b16 %v306
    %v862 = vunpack.c.h.b16 %v306
    %v863 = vunpack.c.l.b16 %v307
    %v864 = vunpack.c.h.b16 %v307
    %v865 = vunpack.c.l.b16 %v308
    %v866 = vunpack.c.h.b16 %v308
    %v867 = vunpack.c.l.b16 %v309
    %v868 = vunpack.c.h.b16 %v309
    %v869 = vunpack.c.l.b16 %v310
    %v870 = vunpack.c.h.b16 %v310
    %v871 = vunpack.c.l.b16 %v311
    %v872 = vunpack.c.h.b16 %v311
    %v873 = vunpack.c.l.b16 %v312
    %v874 = vunpack.c.h.b16 %v312
    %v875 = vunpack.c.l.b16 %v313
    %v876 = vunpack.c.h.b16 %v313
    %v877 = vunpack.c.l.b16 %v314
    %v878 = vunpack.c.h.b16 %v314
    %v879 = vunpack.c.l.b16 %v315
    %v880 = vunpack.c.h.b16 %v315
    %v881 = vunpack.c.l.b16 %v316
    %v882 = vunpack.c.h.b16 %v316
    %v883 = vunpack.c.l.b16 %v317
    %v884 = vunpack.c.h.b16 %v317
    %v885 = vunpack.c.l.b16 %v318
    %v886 = vunpack.c.h.b16 %v318
    %v887 = vunpack.c.l.b16 %v319
    %v888 = vunpack.c.h.b16 %v319
    %v889 = vunpack.c.l.b16 %v320
    %v890 = vunpack.c.h.b16 %v320
    %v891 = vunpack.c.l.b16 %v321
    %v892 = vunpack.c.h.b16 %v321
    %v893 = vunpack.c.l.b16 %v322
    %v894 = vunpack.c.h.b16 %v322
    %v895 = vunpack.c.l.b16 %v323
    %v896 = vunpack.c.h.b16 %v323
    %v897 = vunpack.c.l.b16 %v324
    %v898 = vunpack.c.h.b16 %v324
    %v899 = vunpack.c.l.b16 %v325
    %v900 = vunpack.c.h.b16 %v325
    %v901 = vunpack.c.l.b16 %v326
    %v902 = vunpack.c.h.b16 %v326
    %v903 = vunpack.c.l.b16 %v327
    %v904 = vunpack.c.h.b16 %v327
    %v905 = vunpack.c.l.b16 %v328
    %v906 = vunpack.c.h.b16 %v328
    %v907 = vunpack.c.l.b16 %v329
    %v908 = vunpack.c.h.b16 %v329
    %v909 = vunpack.c.l.b16 %v330
    %v910 = vunpack.c.h.b16 %v330
    %v911 = vunpack.c.l.b16 %v331
    %v912 = vunpack.c.h.b16 %v331
    %v913 = vunpack.c.l.b16 %v332
    %v914 = vunpack.c.h.b16 %v332
    %v915 = vpack.c.b16 %v533, %v531
    %v916 = vpack.c.b16 %v534, %v532
    %v917 = vpack.c.b16 %v537, %v535
    %v918 = vpack.c.b16 %v538, %v536
    %v919 = vpack.c.b16 %v541, %v539
    %v920 = vpack.c.b16 %v542, %v540
    %v921 = vpack.c.b16 %v545, %v543
    %v922 = vpack.c.b16 %v546, %v544
    %v923 = vpack.c.b16 %v549, %v547
    %v924 = vpack.c.b16 %v550, %v548
    %v925 = vpack.c.b16 %v553, %v551
    %v926 = vpack.c.b16 %v554, %v552
    %v927 = vpack.c.b16 %v557, %v555
    %v928 = vpack.c.b16 %v558, %v556
    %v929 = vpack.c.b16 %v561, %v559
    %v930 = vpack.c.b16 %v562, %v560
    %v931 = vpack.c.b16 %v565, %v563
    %v932 = vpack.c.b16 %v566, %v564
    %v933 = vpack.c.b16 %v569, %v567
    %v934 = vpack.c.b16 %v570, %v568
    %v935 = vpack.c.b16 %v573, %v571
    %v936 = vpack.c.b16 %v574, %v572
    %v937 = vpack.c.b16 %v577, %v575
    %v938 = vpack.c.b16 %v578, %v576
    %v939 = vpack.c.b16 %v581, %v579
    %v940 = vpack.c.b16 %v582, %v580
    %v941 = vpack.c.b16 %v585, %v583
    %v942 = vpack.c.b16 %v586, %v584
    %v943 = vpack.c.b16 %v589, %v587
    %v944 = vpack.c.b16 %v590, %v588
    %v945 = vpack.c.b16 %v593, %v591
    %v946 = vpack.c.b16 %v594, %v592
    %v947 = vpack.c.b16 %v597, %v595
    %v948 = vpack.c.b16 %v598, %v596
    %v949 = vpack.c.b16 %v601, %v599
    %v950 = vpack.c.b16 %v602, %v600
    %v951 = vpack.c.b16 %v605, %v603
    %v952 = vpack.c.b16 %v606, %v604
    %v953 = vpack.c.b16 %v609, %v607
    %v954 = vpack.c.b16 %v610, %v608
    %v955 = vpack.c.b16 %v613, %v611
    %v956 = vpack.c.b16 %v614, %v612
    %v957 = vpack.c.b16 %v617, %v615
    %v958 = vpack.c.b16 %v618, %v616
    %v959 = vpack.c.b16 %v621, %v619
    %v960 = vpack.c.b16 %v622, %v620
    %v961 = vpack.c.b16 %v625, %v623
    %v962 = vpack.c.b16 %v626, %v624
    %v963 = vpack.c.b16 %v629, %v627
    %v964 = vpack.c.b16 %v630, %v628
    %v965 = vpack.c.b16 %v633, %v631
    %v966 = vpack.c.b16 %v634, %v632
    %v967 = vpack.c.b16 %v637, %v635
    %v968 = vpack.c.b16 %v638, %v636
    %v969 = vpack.c.b16 %v641, %v639
    %v970 = vpack.c.b16 %v642, %v640
    %v971 = vpack.c.b16 %v645, %v643
    %v972 = vpack.c.b16 %v646, %v644
    %v973 = vpack.c.b16 %v649, %v647
    %v974 = vpack.c.b16 %v650, %v648
    %v975 = vpack.c.b16 %v653, %v651
    %v976 = vpack.c.b16 %v654, %v652
    %v977 = vpack.c.b16 %v657, %v655
    %v978 = vpack.c.b16 %v658, %v656
    %v979 = vpack.c.b16 %v661, %v659
    %v980 = vpack.c.b16 %v662, %v660
    %v981 = vpack.c.b16 %v665, %v663
    %v982 = vpack.c.b16 %v666, %v664
    %v983 = vpack.c.b16 %v669, %v667
    %v984 = vpack.c.b16 %v670, %v668
    %v985 = vpack.c.b16 %v673, %v671
    %v986 = vpack.c.b16 %v674, %v672
    %v987 = vpack.c.b16 %v677, %v675
    %v988 = vpack.c.b16 %v678, %v676
    %v989 = vpack.c.b16 %v681, %v679
    %v990 = vpack.c.b16 %v682, %v680
    %v991 = vpack.c.b16 %v685, %v683
    %v992 = vpack.c.b16 %v686, %v684
    %v993 = vpack.c.b16 %v689, %v687
    %v994 = vpack.c.b16 %v690, %v688
    %v995 = vpack.c.b16 %v693, %v691
    %v996 = vpack.c.b16 %v694, %v692
    %v997 = vpack.c.b16 %v697, %v695
    %v998 = vpack.c.b16 %v698, %v696
    %v999 = vpack.c.b16 %v701, %v699
    %v1000 = vpack.c.b16 %v702, %v700
    %v1001 = vpack.c.b16 %v705, %v703
    %v1002 = vpack.c.b16 %v706, %v704
    %v1003 = vpack.c.b16 %v709, %v707
    %v1004 = vpack.c.b16 %v710, %v708
    %v1005 = vpack.c.b16 %v713, %v711
    %v1006 = vpack.c.b16 %v714, %v712
    %v1007 = vpack.c.b16 %v717, %v715
    %v1008 = vpack.c.b16 %v718, %v716
    %v1009 = vpack.c.b16 %v721, %v719
    %v1010 = vpack.c.b16 %v722, %v720
    %v1011 = vpack.c.b16 %v725, %v723
    %v1012 = vpack.c.b16 %v726, %v724
    %v1013 = vpack.c.b16 %v729, %v727
    %v1014 = vpack.c.b16 %v730, %v728
    %v1015 = vpack.c.b16 %v733, %v731
    %v1016 = vpack.c.b16 %v734, %v732
    %v1017 = vpack.c.b16 %v737, %v735
    %v1018 = vpack.c.b16 %v738, %v736
    %v1019 = vpack.c.b16 %v741, %v739
    %v1020 = vpack.c.b16 %v742, %v740
    %v1021 = vpack.c.b16 %v745, %v743
    %v1022 = vpack.c.b16 %v746, %v744
    %v1023 = vpack.c.b16 %v749, %v747
    %v1024 = vpack.c.b16 %v750, %v748
    %v1025 = vpack.c.b16 %v753, %v751
    %v1026 = vpack.c.b16 %v754, %v752
    %v1027 = vpack.c.b16 %v757, %v755
    %v1028 = vpack.c.b16 %v758, %v756
    %v1029 = vpack.c.b16 %v761, %v759
    %v1030 = vpack.c.b16 %v762, %v760
    %v1031 = vpack.c.b16 %v765, %v763
    %v1032 = vpack.c.b16 %v766, %v764
    %v1033 = vpack.c.b16 %v769, %v767
    %v1034 = vpack.c.b16 %v770, %v768
    %v1035 = vpack.c.b16 %v773, %v771
    %v1036 = vpack.c.b16 %v774, %v772
    %v1037 = vpack.c.b16 %v777, %v775
    %v1038 = vpack.c.b16 %v778, %v776
    %v1039 = vpack.c.b16 %v781, %v779
    %v1040 = vpack.c.b16 %v782, %v780
    %v1041 = vpack.c.b16 %v785, %v783
    %v1042 = vpack.c.b16 %v786, %v784
    %v1043 = vpack.c.b16 %v789, %v787
    %v1044 = vpack.c.b16 %v790, %v788
    %v1045 = vpack.c.b16 %v793, %v791
    %v1046 = vpack.c.b16 %v794, %v792
    %v1047 = vpack.c.b16 %v797, %v795
    %v1048 = vpack.c.b16 %v798, %v796
    %v1049 = vpack.c.b16 %v801, %v799
    %v1050 = vpack.c.b16 %v802, %v800
    %v1051 = vpack.c.b16 %v805, %v803
    %v1052 = vpack.c.b16 %v806, %v804
    %v1053 = vpack.c.b16 %v809, %v807
    %v1054 = vpack.c.b16 %v810, %v808
    %v1055 = vpack.c.b16 %v813, %v811
    %v1056 = vpack.c.b16 %v814, %v812
    %v1057 = vpack.c.b16 %v817, %v815
    %v1058 = vpack.c.b16 %v818, %v816
    %v1059 = vpack.c.b16 %v821, %v819
    %v1060 = vpack.c.b16 %v822, %v820
    %v1061 = vpack.c.b16 %v825, %v823
    %v1062 = vpack.c.b16 %v826, %v824
    %v1063 = vpack.c.b16 %v829, %v827
    %v1064 = vpack.c.b16 %v830, %v828
    %v1065 = vpack.c.b16 %v833, %v831
    %v1066 = vpack.c.b16 %v834, %v832
    %v1067 = vpack.c.b16 %v837, %v835
    %v1068 = vpack.c.b16 %v838, %v836
    %v1069 = vpack.c.b16 %v841, %v839
    %v1070 = vpack.c.b16 %v842, %v840
    %v1071 = vpack.c.b16 %v845, %v843
    %v1072 = vpack.c.b16 %v846, %v844
    %v1073 = vpack.c.b16 %v849, %v847
    %v1074 = vpack.c.b16 %v850, %v848
    %v1075 = vpack.c.b16 %v853, %v851
    %v1076 = vpack.c.b16 %v854, %v852
    %v1077 = vpack.c.b16 %v857, %v855
    %v1078 = vpack.c.b16 %v858, %v856
    %v1079 = vpack.c.b16 %v861, %v859
    %v1080 = vpack.c.b16 %v862, %v860
    %v1081 = vpack.c.b16 %v865, %v863
    %v1082 = vpack.c.b16 %v866, %v864
    %v1083 = vpack.c.b16 %v869, %v867
    %v1084 = vpack.c.b16 %v870, %v868
    %v1085 = vpack.c.b16 %v873, %v871
    %v1086 = vpack.c.b16 %v874, %v872
    %v1087 = vpack.c.b16 %v877, %v875
    %v1088 = vpack.c.b16 %v878, %v876
    %v1089 = vpack.c.b16 %v881, %v879
    %v1090 = vpack.c.b16 %v882, %v880
    %v1091 = vpack.c.b16 %v885, %v883
    %v1092 = vpack.c.b16 %v886, %v884
    %v1093 = vpack.c.b16 %v889, %v887
    %v1094 = vpack.c.b16 %v890, %v888
    %v1095 = vpack.c.b16 %v893, %v891
    %v1096 = vpack.c.b16 %v894, %v892
    %v1097 = vpack.c.b16 %v897, %v895
    %v1098 = vpack.c.b16 %v898, %v896
    %v1099 = vpack.c.b16 %v901, %v899
    %v1100 = vpack.c.b16 %v902, %v900
    %v1101 = vpack.c.b16 %v905, %v903
    %v1102 = vpack.c.b16 %v906, %v904
    %v1103 = vpack.c.b16 %v909, %v907
    %v1104 = vpack.c.b16 %v910, %v908
    %v1105 = vpack.c.b16 %v913, %v911
    %v1106 = vpack.c.b16 %v914, %v912
    %1299 = vmatpush.bf16.msra.mxu0 %v929
    %1300 = vmatpush.bf16.msra.mxu0 %v927
    %1301 = vmatpush.bf16.msra.mxu0 %v925
    %1302 = vmatpush.bf16.msra.mxu0 %v923
    %1303 = vmatpush.bf16.msra.mxu0 %v921
    %1304 = vmatpush.bf16.msra.mxu0 %v919
    %1305 = vmatpush.bf16.msra.mxu0 %v917
    %1306 = vmatpush.bf16.msra.mxu0 %v915
    %1307 = vmatmul.bf16.gmra.mxu0 %v129
    %v1308 = vpop.f32.mrf.mxu0
    %v1309 = vadd.f32 %v335, %v1308
    %v1310 = vpop.f32.mrf.mxu0
    %1311 = vdwg.mxu0
    %1312 = vmatpush.bf16.msra.mxu0 %v945
    %1313 = vmatpush.bf16.msra.mxu0 %v943
    %1314 = vmatpush.bf16.msra.mxu0 %v941
    %1315 = vmatpush.bf16.msra.mxu0 %v939
    %1316 = vmatpush.bf16.msra.mxu0 %v937
    %1317 = vmatpush.bf16.msra.mxu0 %v935
    %1318 = vmatpush.bf16.msra.mxu0 %v933
    %1319 = vmatpush.bf16.msra.mxu0 %v931
    %1320 = vmatmul.bf16.gmra.mxu0 %v130
    %v1321 = vpop.f32.mrf.mxu0
    %v1322 = vadd.f32 %v1309, %v1321
    %v1323 = vpop.f32.mrf.mxu0
    %1324 = vdwg.mxu0
    %1325 = vmatpush.bf16.msra.mxu0 %v961
    %1326 = vmatpush.bf16.msra.mxu0 %v959
    %1327 = vmatpush.bf16.msra.mxu0 %v957
    %1328 = vmatpush.bf16.msra.mxu0 %v955
    %1329 = vmatpush.bf16.msra.mxu0 %v953
    %1330 = vmatpush.bf16.msra.mxu0 %v951
    %1331 = vmatpush.bf16.msra.mxu0 %v949
    %1332 = vmatpush.bf16.msra.mxu0 %v947
    %1333 = vmatmul.bf16.gmra.mxu0 %v131
    %v1334 = vpop.f32.mrf.mxu0
    %v1335 = vadd.f32 %v1322, %v1334
    %v1336 = vpop.f32.mrf.mxu0
    %1337 = vdwg.mxu0
    %1338 = vmatpush.bf16.msra.mxu0 %v977
    %1339 = vmatpush.bf16.msra.mxu0 %v975
    %1340 = vmatpush.bf16.msra.mxu0 %v973
    %1341 = vmatpush.bf16.msra.mxu0 %v971
    %1342 = vmatpush.bf16.msra.mxu0 %v969
    %1343 = vmatpush.bf16.msra.mxu0 %v967
    %1344 = vmatpush.bf16.msra.mxu0 %v965
    %1345 = vmatpush.bf16.msra.mxu0 %v963
    %1346 = vmatmul.bf16.gmra.mxu0 %v132
    %v1347 = vpop.f32.mrf.mxu0
    %v1348 = vadd.f32 %v1335, %v1347
    %v1349 = vpop.f32.mrf.mxu0
    %1350 = vdwg.mxu0
    %1351 = vmatpush.bf16.msra.mxu0 %v993
    %1352 = vmatpush.bf16.msra.mxu0 %v991
    %1353 = vmatpush.bf16.msra.mxu0 %v989
    %1354 = vmatpush.bf16.msra.mxu0 %v987
    %1355 = vmatpush.bf16.msra.mxu0 %v985
    %1356 = vmatpush.bf16.msra.mxu0 %v983
    %1357 = vmatpush.bf16.msra.mxu0 %v981
    %1358 = vmatpush.bf16.msra.mxu0 %v979
    %1359 = vmatmul.bf16.gmra.mxu0 %v133
    %v1360 = vpop.f32.mrf.mxu0
    %v1361 = vadd.f32 %v1348, %v1360
    %v1362 = vpop.f32.mrf.mxu0
    %1363 = vdwg.mxu0
    %1364 = vmatpush.bf16.msra.mxu0 %v1009
    %1365 = vmatpush.bf16.msra.mxu0 %v1007
    %1366 = vmatpush.bf16.msra.mxu0 %v1005
    %1367 = vmatpush.bf16.msra.mxu0 %v1003
    %1368 = vmatpush.bf16.msra.mxu0 %v1001
    %1369 = vmatpush.bf16.msra.mxu0 %v999
    %1370 = vmatpush.bf16.msra.mxu0 %v997
    %1371 = vmatpush.bf16.msra.mxu0 %v995
    %1372 = vmatmul.bf16.gmra.mxu0 %v134
    %v1373 = vpop.f32.mrf.mxu0
    %v1374 = vadd.f32 %v1361, %v1373
    %v1375 = vpop.f32.mrf.mxu0
    %1376 = vdwg.mxu0
    %1377 = vmatpush.bf16.msra.mxu0 %v1025
    %1378 = vmatpush.bf16.msra.mxu0 %v1023
    %1379 = vmatpush.bf16.msra.mxu0 %v1021
    %1380 = vmatpush.bf16.msra.mxu0 %v1019
    %1381 = vmatpush.bf16.msra.mxu0 %v1017
    %1382 = vmatpush.bf16.msra.mxu0 %v1015
    %1383 = vmatpush.bf16.msra.mxu0 %v1013
    %1384 = vmatpush.bf16.msra.mxu0 %v1011
    %1385 = vmatmul.bf16.gmra.mxu0 %v135
    %v1386 = vpop.f32.mrf.mxu0
    %v1387 = vadd.f32 %v1374, %v1386
    %v1388 = vpop.f32.mrf.mxu0
    %1389 = vdwg.mxu0
    %1390 = vmatpush.bf16.msra.mxu0 %v1041
    %1391 = vmatpush.bf16.msra.mxu0 %v1039
    %1392 = vmatpush.bf16.msra.mxu0 %v1037
    %1393 = vmatpush.bf16.msra.mxu0 %v1035
    %1394 = vmatpush.bf16.msra.mxu0 %v1033
    %1395 = vmatpush.bf16.msra.mxu0 %v1031
    %1396 = vmatpush.bf16.msra.mxu0 %v1029
    %1397 = vmatpush.bf16.msra.mxu0 %v1027
    %1398 = vmatmul.bf16.gmra.mxu0 %v136
    %v1399 = vpop.f32.mrf.mxu0
    %v1400 = vadd.f32 %v1387, %v1399
    %v1401 = vpop.f32.mrf.mxu0
    %1402 = vdwg.mxu0
    %1403 = vmatpush.bf16.msra.mxu0 %v1057
    %1404 = vmatpush.bf16.msra.mxu0 %v1055
    %1405 = vmatpush.bf16.msra.mxu0 %v1053
    %1406 = vmatpush.bf16.msra.mxu0 %v1051
    %1407 = vmatpush.bf16.msra.mxu0 %v1049
    %1408 = vmatpush.bf16.msra.mxu0 %v1047
    %1409 = vmatpush.bf16.msra.mxu0 %v1045
    %1410 = vmatpush.bf16.msra.mxu0 %v1043
    %1411 = vmatmul.bf16.gmra.mxu0 %v137
    %v1412 = vpop.f32.mrf.mxu0
    %v1413 = vadd.f32 %v1400, %v1412
    %v1414 = vpop.f32.mrf.mxu0
    %1415 = vdwg.mxu0
    %1416 = vmatpush.bf16.msra.mxu0 %v1073
    %1417 = vmatpush.bf16.msra.mxu0 %v1071
    %1418 = vmatpush.bf16.msra.mxu0 %v1069
    %1419 = vmatpush.bf16.msra.mxu0 %v1067
    %1420 = vmatpush.bf16.msra.mxu0 %v1065
    %1421 = vmatpush.bf16.msra.mxu0 %v1063
    %1422 = vmatpush.bf16.msra.mxu0 %v1061
    %1423 = vmatpush.bf16.msra.mxu0 %v1059
    %1424 = vmatmul.bf16.gmra.mxu0 %v138
    %v1425 = vpop.f32.mrf.mxu0
    %v1426 = vadd.f32 %v1413, %v1425
    %v1427 = vpop.f32.mrf.mxu0
    %1428 = vdwg.mxu0
    %1429 = vmatpush.bf16.msra.mxu0 %v1089
    %1430 = vmatpush.bf16.msra.mxu0 %v1087
    %1431 = vmatpush.bf16.msra.mxu0 %v1085
    %1432 = vmatpush.bf16.msra.mxu0 %v1083
    %1433 = vmatpush.bf16.msra.mxu0 %v1081
    %1434 = vmatpush.bf16.msra.mxu0 %v1079
    %1435 = vmatpush.bf16.msra.mxu0 %v1077
    %1436 = vmatpush.bf16.msra.mxu0 %v1075
    %1437 = vmatmul.bf16.gmra.mxu0 %v139
    %v1438 = vpop.f32.mrf.mxu0
    %v1439 = vadd.f32 %v1426, %v1438
    %v1440 = vpop.f32.mrf.mxu0
    %1441 = vdwg.mxu0
    %1442 = vmatpush.bf16.msra.mxu0 %v1105
    %1443 = vmatpush.bf16.msra.mxu0 %v1103
    %1444 = vmatpush.bf16.msra.mxu0 %v1101
    %1445 = vmatpush.bf16.msra.mxu0 %v1099
    %1446 = vmatpush.bf16.msra.mxu0 %v1097
    %1447 = vmatpush.bf16.msra.mxu0 %v1095
    %1448 = vmatpush.bf16.msra.mxu0 %v1093
    %1449 = vmatpush.bf16.msra.mxu0 %v1091
    %1450 = vmatmul.bf16.gmra.mxu0 %v140
    %v1451 = vpop.f32.mrf.mxu0
    %v1452 = vadd.f32 %v1439, %v1451
    %v1453 = vpop.f32.mrf.mxu0
    %1454 = vdwg.mxu0
    %1455 = vmatpush.bf16.msra.mxu0 %v930
    %1456 = vmatpush.bf16.msra.mxu0 %v928
    %1457 = vmatpush.bf16.msra.mxu0 %v926
    %1458 = vmatpush.bf16.msra.mxu0 %v924
    %1459 = vmatpush.bf16.msra.mxu0 %v922
    %1460 = vmatpush.bf16.msra.mxu0 %v920
    %1461 = vmatpush.bf16.msra.mxu0 %v918
    %1462 = vmatpush.bf16.msra.mxu0 %v916
    %1463 = vmatmul.bf16.gmra.mxu0 %v129
    %v1464 = vpop.f32.mrf.mxu0
    %v1465 = vadd.f32 %v336, %v1464
    %v1466 = vpop.f32.mrf.mxu0
    %1467 = vdwg.mxu0
    %1468 = vmatpush.bf16.msra.mxu0 %v946
    %1469 = vmatpush.bf16.msra.mxu0 %v944
    %1470 = vmatpush.bf16.msra.mxu0 %v942
    %1471 = vmatpush.bf16.msra.mxu0 %v940
    %1472 = vmatpush.bf16.msra.mxu0 %v938
    %1473 = vmatpush.bf16.msra.mxu0 %v936
    %1474 = vmatpush.bf16.msra.mxu0 %v934
    %1475 = vmatpush.bf16.msra.mxu0 %v932
    %1476 = vmatmul.bf16.gmra.mxu0 %v130
    %v1477 = vpop.f32.mrf.mxu0
    %v1478 = vadd.f32 %v1465, %v1477
    %v1479 = vpop.f32.mrf.mxu0
    %1480 = vdwg.mxu0
    %1481 = vmatpush.bf16.msra.mxu0 %v962
    %1482 = vmatpush.bf16.msra.mxu0 %v960
    %1483 = vmatpush.bf16.msra.mxu0 %v958
    %1484 = vmatpush.bf16.msra.mxu0 %v956
    %1485 = vmatpush.bf16.msra.mxu0 %v954
    %1486 = vmatpush.bf16.msra.mxu0 %v952
    %1487 = vmatpush.bf16.msra.mxu0 %v950
    %1488 = vmatpush.bf16.msra.mxu0 %v948
    %1489 = vmatmul.bf16.gmra.mxu0 %v131
    %v1490 = vpop.f32.mrf.mxu0
    %v1491 = vadd.f32 %v1478, %v1490
    %v1492 = vpop.f32.mrf.mxu0
    %1493 = vdwg.mxu0
    %1494 = vmatpush.bf16.msra.mxu0 %v978
    %1495 = vmatpush.bf16.msra.mxu0 %v976
    %1496 = vmatpush.bf16.msra.mxu0 %v974
    %1497 = vmatpush.bf16.msra.mxu0 %v972
    %1498 = vmatpush.bf16.msra.mxu0 %v970
    %1499 = vmatpush.bf16.msra.mxu0 %v968
    %1500 = vmatpush.bf16.msra.mxu0 %v966
    %1501 = vmatpush.bf16.msra.mxu0 %v964
    %1502 = vmatmul.bf16.gmra.mxu0 %v132
    %v1503 = vpop.f32.mrf.mxu0
    %v1504 = vadd.f32 %v1491, %v1503
    %v1505 = vpop.f32.mrf.mxu0
    %1506 = vdwg.mxu0
    %1507 = vmatpush.bf16.msra.mxu0 %v994
    %1508 = vmatpush.bf16.msra.mxu0 %v992
    %1509 = vmatpush.bf16.msra.mxu0 %v990
    %1510 = vmatpush.bf16.msra.mxu0 %v988
    %1511 = vmatpush.bf16.msra.mxu0 %v986
    %1512 = vmatpush.bf16.msra.mxu0 %v984
    %1513 = vmatpush.bf16.msra.mxu0 %v982
    %1514 = vmatpush.bf16.msra.mxu0 %v980
    %1515 = vmatmul.bf16.gmra.mxu0 %v133
    %v1516 = vpop.f32.mrf.mxu0
    %v1517 = vadd.f32 %v1504, %v1516
    %v1518 = vpop.f32.mrf.mxu0
    %1519 = vdwg.mxu0
    %1520 = vmatpush.bf16.msra.mxu0 %v1010
    %1521 = vmatpush.bf16.msra.mxu0 %v1008
    %1522 = vmatpush.bf16.msra.mxu0 %v1006
    %1523 = vmatpush.bf16.msra.mxu0 %v1004
    %1524 = vmatpush.bf16.msra.mxu0 %v1002
    %1525 = vmatpush.bf16.msra.mxu0 %v1000
    %1526 = vmatpush.bf16.msra.mxu0 %v998
    %1527 = vmatpush.bf16.msra.mxu0 %v996
    %1528 = vmatmul.bf16.gmra.mxu0 %v134
    %v1529 = vpop.f32.mrf.mxu0
    %v1530 = vadd.f32 %v1517, %v1529
    %v1531 = vpop.f32.mrf.mxu0
    %1532 = vdwg.mxu0
    %1533 = vmatpush.bf16.msra.mxu0 %v1026
    %1534 = vmatpush.bf16.msra.mxu0 %v1024
    %1535 = vmatpush.bf16.msra.mxu0 %v1022
    %1536 = vmatpush.bf16.msra.mxu0 %v1020
    %1537 = vmatpush.bf16.msra.mxu0 %v1018
    %1538 = vmatpush.bf16.msra.mxu0 %v1016
    %1539 = vmatpush.bf16.msra.mxu0 %v1014
    %1540 = vmatpush.bf16.msra.mxu0 %v1012
    %1541 = vmatmul.bf16.gmra.mxu0 %v135
    %v1542 = vpop.f32.mrf.mxu0
    %v1543 = vadd.f32 %v1530, %v1542
    %v1544 = vpop.f32.mrf.mxu0
    %1545 = vdwg.mxu0
    %1546 = vmatpush.bf16.msra.mxu0 %v1042
    %1547 = vmatpush.bf16.msra.mxu0 %v1040
    %1548 = vmatpush.bf16.msra.mxu0 %v1038
    %1549 = vmatpush.bf16.msra.mxu0 %v1036
    %1550 = vmatpush.bf16.msra.mxu0 %v1034
    %1551 = vmatpush.bf16.msra.mxu0 %v1032
    %1552 = vmatpush.bf16.msra.mxu0 %v1030
    %1553 = vmatpush.bf16.msra.mxu0 %v1028
    %1554 = vmatmul.bf16.gmra.mxu0 %v136
    %v1555 = vpop.f32.mrf.mxu0
    %v1556 = vadd.f32 %v1543, %v1555
    %v1557 = vpop.f32.mrf.mxu0
    %1558 = vdwg.mxu0
    %1559 = vmatpush.bf16.msra.mxu0 %v1058
    %1560 = vmatpush.bf16.msra.mxu0 %v1056
    %1561 = vmatpush.bf16.msra.mxu0 %v1054
    %1562 = vmatpush.bf16.msra.mxu0 %v1052
    %1563 = vmatpush.bf16.msra.mxu0 %v1050
    %1564 = vmatpush.bf16.msra.mxu0 %v1048
    %1565 = vmatpush.bf16.msra.mxu0 %v1046
    %1566 = vmatpush.bf16.msra.mxu0 %v1044
    %1567 = vmatmul.bf16.gmra.mxu0 %v137
    %v1568 = vpop.f32.mrf.mxu0
    %v1569 = vadd.f32 %v1556, %v1568
    %v1570 = vpop.f32.mrf.mxu0
    %1571 = vdwg.mxu0
    %1572 = vmatpush.bf16.msra.mxu0 %v1074
    %1573 = vmatpush.bf16.msra.mxu0 %v1072
    %1574 = vmatpush.bf16.msra.mxu0 %v1070
    %1575 = vmatpush.bf16.msra.mxu0 %v1068
    %1576 = vmatpush.bf16.msra.mxu0 %v1066
    %1577 = vmatpush.bf16.msra.mxu0 %v1064
    %1578 = vmatpush.bf16.msra.mxu0 %v1062
    %1579 = vmatpush.bf16.msra.mxu0 %v1060
    %1580 = vmatmul.bf16.gmra.mxu0 %v138
    %v1581 = vpop.f32.mrf.mxu0
    %v1582 = vadd.f32 %v1569, %v1581
    %v1583 = vpop.f32.mrf.mxu0
    %1584 = vdwg.mxu0
    %1585 = vmatpush.bf16.msra.mxu0 %v1090
    %1586 = vmatpush.bf16.msra.mxu0 %v1088
    %1587 = vmatpush.bf16.msra.mxu0 %v1086
    %1588 = vmatpush.bf16.msra.mxu0 %v1084
    %1589 = vmatpush.bf16.msra.mxu0 %v1082
    %1590 = vmatpush.bf16.msra.mxu0 %v1080
    %1591 = vmatpush.bf16.msra.mxu0 %v1078
    %1592 = vmatpush.bf16.msra.mxu0 %v1076
    %1593 = vmatmul.bf16.gmra.mxu0 %v139
    %v1594 = vpop.f32.mrf.mxu0
    %v1595 = vadd.f32 %v1582, %v1594
    %v1596 = vpop.f32.mrf.mxu0
    %1597 = vdwg.mxu0
    %1598 = vmatpush.bf16.msra.mxu0 %v1106
    %1599 = vmatpush.bf16.msra.mxu0 %v1104
    %1600 = vmatpush.bf16.msra.mxu0 %v1102
    %1601 = vmatpush.bf16.msra.mxu0 %v1100
    %1602 = vmatpush.bf16.msra.mxu0 %v1098
    %1603 = vmatpush.bf16.msra.mxu0 %v1096
    %1604 = vmatpush.bf16.msra.mxu0 %v1094
    %1605 = vmatpush.bf16.msra.mxu0 %v1092
    %1606 = vmatmul.bf16.gmra.mxu0 %v140
    %v1607 = vpop.f32.mrf.mxu0
    %v1608 = vadd.f32 %v1595, %v1607
    %v1609 = vpop.f32.mrf.mxu0
    %1610 = vdwg.mxu0
    %v1611 = vmul.f32 %v1452, %v1452
    %v1612 = vmul.f32 %v1608, %v1608
    %v1613 = vmul.f32 %v1452, %v1611
    %v1614 = vmul.f32 %v1608, %v1612
    %v1615 = vmul.f32 %v1613, 0.044715
    %v1616 = vmul.f32 %v1614, 0.044715
    %v1617 = vadd.f32 %v1452, %v1615
    %v1618 = vadd.f32 %v1608, %v1616
    %v1619 = vmul.f32 %v1617, 0.7978846
    %v1620 = vmul.f32 %v1618, 0.7978846
    %v1621 = vtanh.pop %v1619
    %v1622 = vtanh.pop %v1620
    %v1623 = vadd.f32 %v1621, 1.0
    %v1624 = vadd.f32 %v1622, 1.0
    %v1625 = vmul.f32 %v1623, 0.5
    %v1626 = vmul.f32 %v1624, 0.5
    %v1627 = vmul.f32 %v1452, %v1625
    %v1628 = vmul.f32 %v1608, %v1626
    %v1629 = vpack.c.bf16 %v1627, %v1627
    %v1630 = vpack.c.bf16 %v1628, %v1628
    %v1631 = vld [vmem:[#allocation7] sm:$0xff]
    %v1632 = vld [vmem:[#allocation7 + $0x8] sm:$0xff]
    %v1633 = vld [vmem:[#allocation7 + $0x10] sm:$0xff]
    %v1634 = vld [vmem:[#allocation7 + $0x18] sm:$0xff]
    %v1635 = vld [vmem:[#allocation7 + $0x20] sm:$0xff]
    %v1636 = vld [vmem:[#allocation7 + $0x28] sm:$0xff]
    %v1637 = vld [vmem:[#allocation7 + $0x30] sm:$0xff]
    %v1638 = vld [vmem:[#allocation7 + $0x38] sm:$0xff]
    %v1639 = vld [vmem:[#allocation7 + $0x40] sm:$0xff]
    %v1640 = vld [vmem:[#allocation7 + $0x48] sm:$0xff]
    %v1641 = vld [vmem:[#allocation7 + $0x50] sm:$0xff]
    %v1642 = vld [vmem:[#allocation7 + $0x58] sm:$0xff]
    %v1643 = vld [vmem:[#allocation7 + $0x60] sm:$0xff]
    %v1644 = vld [vmem:[#allocation7 + $0x68] sm:$0xff]
    %v1645 = vld [vmem:[#allocation7 + $0x70] sm:$0xff]
    %v1646 = vld [vmem:[#allocation7 + $0x78] sm:$0xff]
    %v1647 = vld [vmem:[#allocation7 + $0x80] sm:$0xff]
    %v1648 = vld [vmem:[#allocation7 + $0x88] sm:$0xff]
    %v1649 = vld [vmem:[#allocation7 + $0x90] sm:$0xff]
    %v1650 = vld [vmem:[#allocation7 + $0x98] sm:$0xff]
    %v1651 = vld [vmem:[#allocation7 + $0xa0] sm:$0xff]
    %v1652 = vld [vmem:[#allocation7 + $0xa8] sm:$0xff]
    %v1653 = vld [vmem:[#allocation7 + $0xb0] sm:$0xff]
    %v1654 = vld [vmem:[#allocation7 + $0xb8] sm:$0xff]
    %v1655 = vld [vmem:[#allocation7 + $0xc0] sm:$0xff]
    %v1656 = vld [vmem:[#allocation7 + $0xc8] sm:$0xff]
    %v1657 = vld [vmem:[#allocation7 + $0xd0] sm:$0xff]
    %v1658 = vld [vmem:[#allocation7 + $0xd8] sm:$0xff]
    %v1659 = vld [vmem:[#allocation7 + $0xe0] sm:$0xff]
    %v1660 = vld [vmem:[#allocation7 + $0xe8] sm:$0xff]
    %v1661 = vld [vmem:[#allocation7 + $0xf0] sm:$0xff]
    %v1662 = vld [vmem:[#allocation7 + $0xf8] sm:$0xff]
    %v1663 = vld [vmem:[%s4] sm:$0x3]
    %v1665 = vperm.slane %v1663, 0
    %v1666 = vperm.slane %v1663, 1
    %v1701 = vunpack.c.l.b16 %v1631
    %v1702 = vunpack.c.h.b16 %v1631
    %v1703 = vunpack.c.l.b16 %v1632
    %v1704 = vunpack.c.h.b16 %v1632
    %v1705 = vunpack.c.l.b16 %v1633
    %v1706 = vunpack.c.h.b16 %v1633
    %v1707 = vunpack.c.l.b16 %v1634
    %v1708 = vunpack.c.h.b16 %v1634
    %v1709 = vunpack.c.l.b16 %v1635
    %v1710 = vunpack.c.h.b16 %v1635
    %v1711 = vunpack.c.l.b16 %v1636
    %v1712 = vunpack.c.h.b16 %v1636
    %v1713 = vunpack.c.l.b16 %v1637
    %v1714 = vunpack.c.h.b16 %v1637
    %v1715 = vunpack.c.l.b16 %v1638
    %v1716 = vunpack.c.h.b16 %v1638
    %v1717 = vunpack.c.l.b16 %v1639
    %v1718 = vunpack.c.h.b16 %v1639
    %v1719 = vunpack.c.l.b16 %v1640
    %v1720 = vunpack.c.h.b16 %v1640
    %v1721 = vunpack.c.l.b16 %v1641
    %v1722 = vunpack.c.h.b16 %v1641
    %v1723 = vunpack.c.l.b16 %v1642
    %v1724 = vunpack.c.h.b16 %v1642
    %v1725 = vunpack.c.l.b16 %v1643
    %v1726 = vunpack.c.h.b16 %v1643
    %v1727 = vunpack.c.l.b16 %v1644
    %v1728 = vunpack.c.h.b16 %v1644
    %v1729 = vunpack.c.l.b16 %v1645
    %v1730 = vunpack.c.h.b16 %v1645
    %v1731 = vunpack.c.l.b16 %v1646
    %v1732 = vunpack.c.h.b16 %v1646
    %v1733 = vunpack.c.l.b16 %v1647
    %v1734 = vunpack.c.h.b16 %v1647
    %v1735 = vunpack.c.l.b16 %v1648
    %v1736 = vunpack.c.h.b16 %v1648
    %v1737 = vunpack.c.l.b16 %v1649
    %v1738 = vunpack.c.h.b16 %v1649
    %v1739 = vunpack.c.l.b16 %v1650
    %v1740 = vunpack.c.h.b16 %v1650
    %v1741 = vunpack.c.l.b16 %v1651
    %v1742 = vunpack.c.h.b16 %v1651
    %v1743 = vunpack.c.l.b16 %v1652
    %v1744 = vunpack.c.h.b16 %v1652
    %v1745 = vunpack.c.l.b16 %v1653
    %v1746 = vunpack.c.h.b16 %v1653
    %v1747 = vunpack.c.l.b16 %v1654
    %v1748 = vunpack.c.h.b16 %v1654
    %v1749 = vunpack.c.l.b16 %v1655
    %v1750 = vunpack.c.h.b16 %v1655
    %v1751 = vunpack.c.l.b16 %v1656
    %v1752 = vunpack.c.h.b16 %v1656
    %v1753 = vunpack.c.l.b16 %v1657
    %v1754 = vunpack.c.h.b16 %v1657
    %v1755 = vunpack.c.l.b16 %v1658
    %v1756 = vunpack.c.h.b16 %v1658
    %v1757 = vunpack.c.l.b16 %v1659
    %v1758 = vunpack.c.h.b16 %v1659
    %v1759 = vunpack.c.l.b16 %v1660
    %v1760 = vunpack.c.h.b16 %v1660
    %v1761 = vunpack.c.l.b16 %v1661
    %v1762 = vunpack.c.h.b16 %v1661
    %v1763 = vunpack.c.l.b16 %v1662
    %v1764 = vunpack.c.h.b16 %v1662
    %v1765 = vpack.c.b16 %v1703, %v1701
    %v1766 = vpack.c.b16 %v1704, %v1702
    %v1767 = vpack.c.b16 %v1707, %v1705
    %v1768 = vpack.c.b16 %v1708, %v1706
    %v1769 = vpack.c.b16 %v1711, %v1709
    %v1770 = vpack.c.b16 %v1712, %v1710
    %v1771 = vpack.c.b16 %v1715, %v1713
    %v1772 = vpack.c.b16 %v1716, %v1714
    %v1773 = vpack.c.b16 %v1719, %v1717
    %v1774 = vpack.c.b16 %v1720, %v1718
    %v1775 = vpack.c.b16 %v1723, %v1721
    %v1776 = vpack.c.b16 %v1724, %v1722
    %v1777 = vpack.c.b16 %v1727, %v1725
    %v1778 = vpack.c.b16 %v1728, %v1726
    %v1779 = vpack.c.b16 %v1731, %v1729
    %v1780 = vpack.c.b16 %v1732, %v1730
    %v1781 = vpack.c.b16 %v1735, %v1733
    %v1782 = vpack.c.b16 %v1736, %v1734
    %v1783 = vpack.c.b16 %v1739, %v1737
    %v1784 = vpack.c.b16 %v1740, %v1738
    %v1785 = vpack.c.b16 %v1743, %v1741
    %v1786 = vpack.c.b16 %v1744, %v1742
    %v1787 = vpack.c.b16 %v1747, %v1745
    %v1788 = vpack.c.b16 %v1748, %v1746
    %v1789 = vpack.c.b16 %v1751, %v1749
    %v1790 = vpack.c.b16 %v1752, %v1750
    %v1791 = vpack.c.b16 %v1755, %v1753
    %v1792 = vpack.c.b16 %v1756, %v1754
    %v1793 = vpack.c.b16 %v1759, %v1757
    %v1794 = vpack.c.b16 %v1760, %v1758
    %v1795 = vpack.c.b16 %v1763, %v1761
    %v1796 = vpack.c.b16 %v1764, %v1762
    %1829 = vmatpush.bf16.msra.mxu0 %v1779
    %1830 = vmatpush.bf16.msra.mxu0 %v1777
    %1831 = vmatpush.bf16.msra.mxu0 %v1775
    %1832 = vmatpush.bf16.msra.mxu0 %v1773
    %1833 = vmatpush.bf16.msra.mxu0 %v1771
    %1834 = vmatpush.bf16.msra.mxu0 %v1769
    %1835 = vmatpush.bf16.msra.mxu0 %v1767
    %1836 = vmatpush.bf16.msra.mxu0 %v1765
    %1837 = vmatmul.bf16.gmra.mxu0 %v1629
    %v1838 = vpop.f32.mrf.mxu0
    %v1839 = vadd.f32 %v1665, %v1838
    %v1840 = vpop.f32.mrf.mxu0
    %1841 = vdwg.mxu0
    %1842 = vmatpush.bf16.msra.mxu0 %v1795
    %1843 = vmatpush.bf16.msra.mxu0 %v1793
    %1844 = vmatpush.bf16.msra.mxu0 %v1791
    %1845 = vmatpush.bf16.msra.mxu0 %v1789
    %1846 = vmatpush.bf16.msra.mxu0 %v1787
    %1847 = vmatpush.bf16.msra.mxu0 %v1785
    %1848 = vmatpush.bf16.msra.mxu0 %v1783
    %1849 = vmatpush.bf16.msra.mxu0 %v1781
    %1850 = vmatmul.bf16.gmra.mxu0 %v1630
    %v1851 = vpop.f32.mrf.mxu0
    %v1852 = vadd.f32 %v1839, %v1851
    %v1853 = vpop.f32.mrf.mxu0
    %1854 = vdwg.mxu0
    %1855 = vmatpush.bf16.msra.mxu0 %v1780
    %1856 = vmatpush.bf16.msra.mxu0 %v1778
    %1857 = vmatpush.bf16.msra.mxu0 %v1776
    %1858 = vmatpush.bf16.msra.mxu0 %v1774
    %1859 = vmatpush.bf16.msra.mxu0 %v1772
    %1860 = vmatpush.bf16.msra.mxu0 %v1770
    %1861 = vmatpush.bf16.msra.mxu0 %v1768
    %1862 = vmatpush.bf16.msra.mxu0 %v1766
    %1863 = vmatmul.bf16.gmra.mxu0 %v1629
    %v1864 = vpop.f32.mrf.mxu0
    %v1865 = vadd.f32 %v1666, %v1864
    %v1866 = vpop.f32.mrf.mxu0
    %1867 = vdwg.mxu0
    %1868 = vmatpush.bf16.msra.mxu0 %v1796
    %1869 = vmatpush.bf16.msra.mxu0 %v1794
    %1870 = vmatpush.bf16.msra.mxu0 %v1792
    %1871 = vmatpush.bf16.msra.mxu0 %v1790
    %1872 = vmatpush.bf16.msra.mxu0 %v1788
    %1873 = vmatpush.bf16.msra.mxu0 %v1786
    %1874 = vmatpush.bf16.msra.mxu0 %v1784
    %1875 = vmatpush.bf16.msra.mxu0 %v1782
    %1876 = vmatmul.bf16.gmra.mxu0 %v1630
    %v1877 = vpop.f32.mrf.mxu0
    %v1878 = vadd.f32 %v1865, %v1877
    %v1879 = vpop.f32.mrf.mxu0
    %1880 = vdwg.mxu0
    %v1881 = vmul.f32 %v1852, %v1852
    %v1882 = vmul.f32 %v1878, %v1878
    %v1883 = vmul.f32 %v1852, %v1881
    %v1884 = vmul.f32 %v1878, %v1882
    %v1885 = vmul.f32 %v1883, 0.044715
    %v1886 = vmul.f32 %v1884, 0.044715
    %v1887 = vadd.f32 %v1852, %v1885
    %v1888 = vadd.f32 %v1878, %v1886
    %v1889 = vmul.f32 %v1887, 0.7978846
    %v1890 = vmul.f32 %v1888, 0.7978846
    %v1891 = vtanh.pop %v1889
    %v1892 = vtanh.pop %v1890
    %v1893 = vadd.f32 %v1891, 1.0
    %v1894 = vadd.f32 %v1892, 1.0
    %v1895 = vmul.f32 %v1893, 0.5
    %v1896 = vmul.f32 %v1894, 0.5
    %v1897 = vmul.f32 %v1852, %v1895
    %v1898 = vmul.f32 %v1878, %v1896
    %v1899 = vpack.c.bf16 %v1897, %v1897
    %v1900 = vpack.c.bf16 %v1898, %v1898
    %v1901 = vld [vmem:[#allocation8] sm:$0xf]
    %v1902 = vld [vmem:[#allocation8 + $0x4] sm:$0xf]
    %v1903 = vld [vmem:[#allocation8 + $0x8] sm:$0xf]
    %v1904 = vld [vmem:[#allocation8 + $0xc] sm:$0xf]
    %v1905 = vld [vmem:[#allocation8 + $0x10] sm:$0xf]
    %v1906 = vld [vmem:[#allocation8 + $0x14] sm:$0xf]
    %v1907 = vld [vmem:[#allocation8 + $0x18] sm:$0xf]
    %v1908 = vld [vmem:[#allocation8 + $0x1c] sm:$0xf]
    %v1909 = vld [vmem:[#allocation8 + $0x20] sm:$0xf]
    %v1910 = vld [vmem:[#allocation8 + $0x24] sm:$0xf]
    %v1911 = vld [vmem:[#allocation8 + $0x28] sm:$0xf]
    %v1912 = vld [vmem:[#allocation8 + $0x2c] sm:$0xf]
    %v1913 = vld [vmem:[#allocation8 + $0x30] sm:$0xf]
    %v1914 = vld [vmem:[#allocation8 + $0x34] sm:$0xf]
    %v1915 = vld [vmem:[#allocation8 + $0x38] sm:$0xf]
    %v1916 = vld [vmem:[#allocation8 + $0x3c] sm:$0xf]
    %v1917 = vld [vmem:[#allocation8 + $0x40] sm:$0xf]
    %v1918 = vld [vmem:[#allocation8 + $0x44] sm:$0xf]
    %v1919 = vld [vmem:[#allocation8 + $0x48] sm:$0xf]
    %v1920 = vld [vmem:[#allocation8 + $0x4c] sm:$0xf]
    %v1921 = vld [vmem:[#allocation8 + $0x50] sm:$0xf]
    %v1922 = vld [vmem:[#allocation8 + $0x54] sm:$0xf]
    %v1923 = vld [vmem:[#allocation8 + $0x58] sm:$0xf]
    %v1924 = vld [vmem:[#allocation8 + $0x5c] sm:$0xf]
    %v1925 = vld [vmem:[#allocation8 + $0x60] sm:$0xf]
    %v1926 = vld [vmem:[#allocation8 + $0x64] sm:$0xf]
    %v1927 = vld [vmem:[#allocation8 + $0x68] sm:$0xf]
    %v1928 = vld [vmem:[#allocation8 + $0x6c] sm:$0xf]
    %v1929 = vld [vmem:[#allocation8 + $0x70] sm:$0xf]
    %v1930 = vld [vmem:[#allocation8 + $0x74] sm:$0xf]
    %v1931 = vld [vmem:[#allocation8 + $0x78] sm:$0xf]
    %v1932 = vld [vmem:[#allocation8 + $0x7c] sm:$0xf]
    %v1933 = vld [vmem:[%s6] sm:$0x1]
    %v1935 = vperm.slane %v1933, 0
    %v1969 = vunpack.c.l.b16 %v1901
    %v1970 = vunpack.c.l.b16 %v1902
    %v1971 = vunpack.c.l.b16 %v1903
    %v1972 = vunpack.c.l.b16 %v1904
    %v1973 = vunpack.c.l.b16 %v1905
    %v1974 = vunpack.c.l.b16 %v1906
    %v1975 = vunpack.c.l.b16 %v1907
    %v1976 = vunpack.c.l.b16 %v1908
    %v1977 = vunpack.c.l.b16 %v1909
    %v1978 = vunpack.c.l.b16 %v1910
    %v1979 = vunpack.c.l.b16 %v1911
    %v1980 = vunpack.c.l.b16 %v1912
    %v1981 = vunpack.c.l.b16 %v1913
    %v1982 = vunpack.c.l.b16 %v1914
    %v1983 = vunpack.c.l.b16 %v1915
    %v1984 = vunpack.c.l.b16 %v1916
    %v1985 = vunpack.c.l.b16 %v1917
    %v1986 = vunpack.c.l.b16 %v1918
    %v1987 = vunpack.c.l.b16 %v1919
    %v1988 = vunpack.c.l.b16 %v1920
    %v1989 = vunpack.c.l.b16 %v1921
    %v1990 = vunpack.c.l.b16 %v1922
    %v1991 = vunpack.c.l.b16 %v1923
    %v1992 = vunpack.c.l.b16 %v1924
    %v1993 = vunpack.c.l.b16 %v1925
    %v1994 = vunpack.c.l.b16 %v1926
    %v1995 = vunpack.c.l.b16 %v1927
    %v1996 = vunpack.c.l.b16 %v1928
    %v1997 = vunpack.c.l.b16 %v1929
    %v1998 = vunpack.c.l.b16 %v1930
    %v1999 = vunpack.c.l.b16 %v1931
    %v2000 = vunpack.c.l.b16 %v1932
    %v2001 = vpack.c.b16 %v1970, %v1969
    %v2002 = vpack.c.b16 %v1972, %v1971
    %v2003 = vpack.c.b16 %v1974, %v1973
    %v2004 = vpack.c.b16 %v1976, %v1975
    %v2005 = vpack.c.b16 %v1978, %v1977
    %v2006 = vpack.c.b16 %v1980, %v1979
    %v2007 = vpack.c.b16 %v1982, %v1981
    %v2008 = vpack.c.b16 %v1984, %v1983
    %v2009 = vpack.c.b16 %v1986, %v1985
    %v2010 = vpack.c.b16 %v1988, %v1987
    %v2011 = vpack.c.b16 %v1990, %v1989
    %v2012 = vpack.c.b16 %v1992, %v1991
    %v2013 = vpack.c.b16 %v1994, %v1993
    %v2014 = vpack.c.b16 %v1996, %v1995
    %v2015 = vpack.c.b16 %v1998, %v1997
    %v2016 = vpack.c.b16 %v2000, %v1999
    %2033 = vmatpush.bf16.msra.mxu0 %v2008
    %2034 = vmatpush.bf16.msra.mxu0 %v2007
    %2035 = vmatpush.bf16.msra.mxu0 %v2006
    %2036 = vmatpush.bf16.msra.mxu0 %v2005
    %2037 = vmatpush.bf16.msra.mxu0 %v2004
    %2038 = vmatpush.bf16.msra.mxu0 %v2003
    %2039 = vmatpush.bf16.msra.mxu0 %v2002
    %2040 = vmatpush.bf16.msra.mxu0 %v2001
    %2041 = vmatmul.bf16.gmra.mxu0 %v1899
    %v2042 = vpop.f32.mrf.mxu0
    %v2043 = vadd.f32 %v1935, %v2042
    %v2044 = vpop.f32.mrf.mxu0
    %2045 = vdwg.mxu0
    %2046 = vmatpush.bf16.msra.mxu0 %v2016
    %2047 = vmatpush.bf16.msra.mxu0 %v2015
    %2048 = vmatpush.bf16.msra.mxu0 %v2014
    %2049 = vmatpush.bf16.msra.mxu0 %v2013
    %2050 = vmatpush.bf16.msra.mxu0 %v2012
    %2051 = vmatpush.bf16.msra.mxu0 %v2011
    %2052 = vmatpush.bf16.msra.mxu0 %v2010
    %2053 = vmatpush.bf16.msra.mxu0 %v2009
    %2054 = vmatmul.bf16.gmra.mxu0 %v1900
    %v2055 = vpop.f32.mrf.mxu0
    %v2056 = vadd.f32 %v2043, %v2055
    %v2057 = vpop.f32.mrf.mxu0
    %2058 = vdwg.mxu0
    %v2059 = vmul.f32 %v2056, %v2056
    %v2060 = vmul.f32 %v2056, %v2059
    %v2061 = vmul.f32 %v2060, 0.044715
    %v2062 = vadd.f32 %v2056, %v2061
    %v2063 = vmul.f32 %v2062, 0.7978846
    %v2064 = vtanh.pop %v2063
    %v2065 = vadd.f32 %v2064, 1.0
    %v2066 = vmul.f32 %v2065, 0.5
    %v2067 = vmul.f32 %v2056, %v2066
    %v2068 = vpack.c.bf16 %v2067, %v2067
    %v2069 = vld [vmem:[%s7] sm:$0x1]
    %v2070 = vunpack.c.l.bf16 %v2068
    %v2072 = vperm.slane %v2069, 0
    %v2074 = vmul.f32 %v2070, %v2072
    %vm2075 = vcmask 1041408
    %v2076 = vsel %vm2075, %v2074, 0.0
    %2077 = vadd.xlane.f32.xlu0 %v2076
    %v2078 = vpop.xlane.xlu0 %2077
    %v2079 = vld [vmem:[#allocation2] sm:$0x1]
    %v2081 = vperm.slane %v2079, 0
    %v2083 = vadd.f32 %v2078, %v2081
    %vm2084 = vcmask 1024
    %2085 = vst.msk [vmem:[%s9] sm:$0x3] %vm2084, %v2083
    // Predicated region
    $region54: #{tpu_custom_call.1} parent=1 // pred_check
      _
    $region55: #{tpu_custom_call.1} parent=1 // pred_check_branch
      %2087 = sbr.rel (0) target = $region57
    $region56: #{tpu_custom_call.1} parent=1 // pred_region
      _
    $region57: #{tpu_custom_call.1} parent=1 // pred_fallthru
      _
    // Predicated region
    $region58: #{tpu_custom_call.1} parent=1 // pred_check
      _
    $region59: #{tpu_custom_call.1} parent=1 // pred_check_branch
      %2089 = sbr.rel (0) target = $region61
    $region60: #{tpu_custom_call.1} parent=1 // pred_region
      _
    $region61: #{tpu_custom_call.1} parent=1 // pred_fallthru
      _
    %2090 = vsyncpa [#allocation4], 1
    %2091 = vsyncpa [#allocation6], 1
    %2092 = vsyncpa [#allocation9], 1

</llo_original>
